<compile_context>
chip_gen: v7x
topology: tpu7x:2x2x1
jax: 0.10.0
libtpu: 0.0.40
codegen_flags: <defaults>
</compile_context>

<pallas_src>
import functools

import jax
import jax.numpy as jnp
from jax.experimental import pallas as pl
from jax.experimental.pallas import tpu as pltpu


def _round_up(x, m):
    return (x + m - 1) // m * m


def _pick_tile(dim, max_tile, align):
    """Largest multiple of `align` that divides `dim` and is <= max_tile."""
    best = align
    t = align
    while t <= min(dim, max_tile):
        if dim % t == 0:
            best = t
        t += align
    return best


def _pad_gate_lanes(w, h, hp):
    """Re-pack the last dim (4*h, PyTorch gate order i|f|g|o) so each gate
    occupies its own hp-wide, lane-aligned block (zero-padded)."""
    if h == hp:
        return w
    pad = [(0, 0)] * (w.ndim - 1) + [(0, hp - h)]
    parts = [jnp.pad(w[..., k * h:(k + 1) * h], pad) for k in range(4)]
    return jnp.concatenate(parts, axis=-1)


# --------------------------------------------------------------------------
# Kernel 1: time-chunked LSTM recurrence.
#   grid = (n_time_chunks,) with "arbitrary" semantics; (h, c) live in VMEM
#   scratch across chunks.  Per chunk: one batched input-projection matmul,
#   then Tc serial steps with one MXU matmul each.
# --------------------------------------------------------------------------
def _lstm_kernel(x_ref, wih_ref, whh_ref, b_ref, hall_ref,
                 xg_ref, h_ref, c_ref, *, tc, bp, hp, unroll):
    @pl.when(pl.program_id(0) == 0)
    def _():
        h_ref[...] = jnp.zeros_like(h_ref)
        c_ref[...] = jnp.zeros_like(c_ref)

    # Non-recurrent input projection + bias for the whole chunk: one batched
    # MXU matmul, hoisted off the serial critical path.
    xg_ref[...] = (
        jnp.dot(x_ref[...], wih_ref[...], preferred_element_type=jnp.float32)
        + b_ref[...])

    w_hh = whh_ref[...]  # hoisted f32 weight load

    def step(s, carry):
        h, c = carry
        row = pl.multiple_of(s * bp, bp)
        gates = xg_ref[pl.ds(row, bp), :] + jnp.dot(
            h, w_hh, preferred_element_type=jnp.float32)
        # Each gate owns its own hp-wide (lane-aligned) block -> free picks.
        i = jax.nn.sigmoid(gates[:, 0 * hp:1 * hp])
        f = jax.nn.sigmoid(gates[:, 1 * hp:2 * hp])
        g = jnp.tanh(gates[:, 2 * hp:3 * hp])
        o = jax.nn.sigmoid(gates[:, 3 * hp:4 * hp])
        c_new = f * c + i * g
        h_new = o * jnp.tanh(c_new)
        hall_ref[pl.ds(row, bp), :] = h_new.astype(hall_ref.dtype)
        return h_new, c_new

    h_fin, c_fin = jax.lax.fori_loop(
        0, tc, step, (h_ref[...], c_ref[...]), unroll=unroll)
    h_ref[...] = h_fin
    c_ref[...] = c_fin


# --------------------------------------------------------------------------
# Kernel 2: tiled FC projection (standard matmul pattern, P1 + P3 + P9).
# --------------------------------------------------------------------------
def _fc_kernel(h_ref, w_ref, b_ref, o_ref, acc_ref):
    k = pl.program_id(2)

    @pl.when(k == 0)
    def _():
        acc_ref[...] = jnp.zeros_like(acc_ref)

    acc_ref[...] += jnp.dot(h_ref[...], w_ref[...],
                            preferred_element_type=jnp.float32)

    @pl.when(k == pl.num_programs(2) - 1)
    def _():
        o_ref[...] = (acc_ref[...] + b_ref[...]).astype(o_ref.dtype)


def lstm_fc_pallas(x_tbe, w_ih_t, w_hh_t, b_gates, w_fc_t, b_fc,
                   *, matmul_dtype=jnp.float32, time_chunk=8):
    """x_tbe: (T, B, E) time-major LSTM inputs.  Returns (T, B, V) f32 logits."""
    T, B, E = x_tbe.shape
    H = w_hh_t.shape[0]
    V = w_fc_t.shape[1]

    Bp = _round_up(max(B, 8), 8)          # f32 sublane tile
    Hp = _round_up(H, 128)                # lane-aligned gate blocks
    Tc = max(1, min(time_chunk, T))       # timesteps per grid step
    Tp = _round_up(T, Tc)
    R = Tp * Bp                           # total (padded) rows

    # FC tiling: lane-dense vocab tiles, K tiles dividing Hp, row tiles of R.
    tn = min(512, _round_up(V, 128))
    Vp = _round_up(V, tn)
    tk = _pick_tile(Hp, 512, 128)
    rm = _pick_tile(R, 512, 8)

    f32 = jnp.float32
    bytes_mm = jnp.dtype(matmul_dtype).itemsize

    # --- pad / pack operands ------------------------------------------------
    # Padded batch rows and padded (trailing) timesteps are sliced off at the
    # end; padded gate lanes stay exactly 0 through the recurrence because the
    # padded weight/bias columns are 0 and c is initialized to 0.
    x_p = jnp.pad(x_tbe, ((0, Tp - T), (0, Bp - B), (0, 0)))
    x_p = x_p.reshape(R, E).astype(matmul_dtype)

    wih_p = _pad_gate_lanes(w_ih_t, H, Hp).astype(matmul_dtype)               # (E, 4Hp)
    whh_p = jnp.pad(_pad_gate_lanes(w_hh_t, H, Hp),
                    ((0, Hp - H), (0, 0))).astype(f32)                        # (Hp, 4Hp)
    b_p = _pad_gate_lanes(b_gates, H, Hp).astype(f32)                         # (1, 4Hp)
    wfc_p = jnp.pad(w_fc_t, ((0, Hp - H), (0, Vp - V))).astype(matmul_dtype)  # (Hp, Vp)
    bfc_p = jnp.pad(b_fc, ((0, 0), (0, Vp - V))).astype(f32)                  # (1, Vp)

    # --- Stage 1: time-chunked LSTM recurrence -------------------------------
    n_chunks = Tp // Tc
    vmem_a = (2 * Tc * Bp * E * bytes_mm          # x chunk (double-buffered)
              + E * 4 * Hp * bytes_mm             # W_ih (resident)
              + Hp * 4 * Hp * 4                   # W_hh (resident, f32)
              + 4 * Hp * 4                        # bias
              + 2 * Tc * Bp * Hp * bytes_mm       # h_all chunk out (dbl-buf)
              + Tc * Bp * 4 * Hp * 4              # xg scratch
              + 2 * Bp * Hp * 4)                  # (h, c) state
    cost_a = pl.CostEstimate(
        flops=2 * R * (E + Hp) * 4 * Hp,
        transcendentals=5 * R * Hp,
        bytes_accessed=(R * E + E * 4 * Hp + R * Hp) * bytes_mm
        + Hp * 4 * Hp * 4)

    lstm_kernel = functools.partial(
        _lstm_kernel, tc=Tc, bp=Bp, hp=Hp, unroll=min(Tc, 8))

    h_all = pl.pallas_call(
        lstm_kernel,
        out_shape=jax.ShapeDtypeStruct((R, Hp), matmul_dtype),
        grid_spec=pltpu.PrefetchScalarGridSpec(
            num_scalar_prefetch=0,
            grid=(n_chunks,),
            in_specs=[
                pl.BlockSpec((Tc * Bp, E), lambda t: (t, 0)),     # x chunk
                pl.BlockSpec((E, 4 * Hp), lambda t: (0, 0)),      # W_ih
                pl.BlockSpec((Hp, 4 * Hp), lambda t: (0, 0)),     # W_hh
                pl.BlockSpec((1, 4 * Hp), lambda t: (0, 0)),      # bias
            ],
            out_specs=pl.BlockSpec((Tc * Bp, Hp), lambda t: (t, 0)),
            scratch_shapes=[
                pltpu.VMEM((Tc * Bp, 4 * Hp), jnp.float32),       # xg chunk
                pltpu.VMEM((Bp, Hp), jnp.float32),                # h state
                pltpu.VMEM((Bp, Hp), jnp.float32),                # c state
            ]),
        compiler_params=pltpu.CompilerParams(
            dimension_semantics=("arbitrary",),                   # serial carry
            vmem_limit_bytes=int(2 * vmem_a) + (8 << 20)),
        cost_estimate=cost_a,
    )(x_p, wih_p, whh_p, b_p)

    # --- Stage 2: tiled FC projection over all hidden states -----------------
    vmem_b = (2 * (rm * tk * bytes_mm + tk * tn * bytes_mm + rm * tn * 4)
              + tn * 4 + rm * tn * 4)
    cost_b = pl.CostEstimate(
        flops=2 * R * Hp * Vp,
        transcendentals=0,
        bytes_accessed=(R * Hp + Hp * Vp) * bytes_mm + R * Vp * 4)

    out = pl.pallas_call(
        _fc_kernel,
        out_shape=jax.ShapeDtypeStruct((R, Vp), jnp.float32),
        grid_spec=pltpu.PrefetchScalarGridSpec(
            num_scalar_prefetch=0,
            grid=(R // rm, Vp // tn, Hp // tk),
            in_specs=[
                pl.BlockSpec((rm, tk), lambda i, j, k: (i, k)),   # h_all tile
                pl.BlockSpec((tk, tn), lambda i, j, k: (k, j)),   # W_fc tile
                pl.BlockSpec((1, tn), lambda i, j, k: (0, j)),    # bias tile
            ],
            out_specs=pl.BlockSpec((rm, tn), lambda i, j, k: (i, j)),
            scratch_shapes=[pltpu.VMEM((rm, tn), jnp.float32)]),
        compiler_params=pltpu.CompilerParams(
            dimension_semantics=("parallel", "parallel", "arbitrary"),
            vmem_limit_bytes=int(2 * vmem_b) + (8 << 20)),
        cost_estimate=cost_b,
    )(h_all, wfc_p, bfc_p)

    return out.reshape(Tp, Bp, Vp)[:T, :B, :V]                    # (T, B, V)


def decoder_rnn_forward(params, features, captions, *, matmul_dtype=jnp.float32):
    """features: (B, E) float32, captions: (B, T) int32.  Returns (B, T, V)."""
    # captions[:, :-1] -> embed -> concat with features.unsqueeze(1)  (JAX glue)
    cap = captions[:, :-1]                                             # (B, T-1)
    cap_emb = jnp.take(params["emb"], cap, axis=0)                     # (B, T-1, E)
    inputs = jnp.concatenate([features[:, None, :], cap_emb], axis=1)  # (B, T, E)

    x_tbe = jnp.transpose(inputs, (1, 0, 2))                           # (T, B, E)
    logits_tbv = lstm_fc_pallas(
        x_tbe,
        params["w_ih_t"], params["w_hh_t"], params["b_gates"],
        params["w_fc_t"], params["b_fc"],
        matmul_dtype=matmul_dtype,
    )
    return jnp.transpose(logits_tbv, (1, 0, 2))                        # (B, T, V)


def decoder_rnn_reference(params, features, captions):
    """Pure-JAX reference (lax.scan LSTM) for correctness checking."""
    cap = captions[:, :-1]
    cap_emb = jnp.take(params["emb"], cap, axis=0)
    inputs = jnp.concatenate([features[:, None, :], cap_emb], axis=1)
    x_tbe = jnp.transpose(inputs, (1, 0, 2))
    B = inputs.shape[0]
    H = params["w_hh_t"].shape[0]

    def step(carry, x_t):
        h, c = carry
        gates = x_t @ params["w_ih_t"] + h @ params["w_hh_t"] + params["b_gates"]
        i = jax.nn.sigmoid(gates[:, 0 * H:1 * H])
        f = jax.nn.sigmoid(gates[:, 1 * H:2 * H])
        g = jnp.tanh(gates[:, 2 * H:3 * H])
        o = jax.nn.sigmoid(gates[:, 3 * H:4 * H])
        c = f * c + i * g
        h = o * jnp.tanh(c)
        return (h, c), h @ params["w_fc_t"] + params["b_fc"]

    init = (jnp.zeros((B, H), jnp.float32), jnp.zeros((B, H), jnp.float32))
    _, out = jax.lax.scan(step, init, x_tbe)
    return jnp.transpose(out, (1, 0, 2))


def init_params(key, embed_size, hidden_size, vocab_size):
    ks = jax.random.split(key, 6)
    scale = 0.1
    return {
        "emb": scale * jax.random.normal(ks[0], (vocab_size, embed_size), jnp.float32),
        # stored pre-transposed: x @ W_ih^T done as x @ (E, 4H); gate order i|f|g|o
        "w_ih_t": scale * jax.random.normal(ks[1], (embed_size, 4 * hidden_size), jnp.float32),
        "w_hh_t": scale * jax.random.normal(ks[2], (hidden_size, 4 * hidden_size), jnp.float32),
        "b_gates": scale * jax.random.normal(ks[3], (1, 4 * hidden_size), jnp.float32),  # b_ih + b_hh
        "w_fc_t": scale * jax.random.normal(ks[4], (hidden_size, vocab_size), jnp.float32),
        "b_fc": scale * jax.random.normal(ks[5], (1, vocab_size), jnp.float32),
    }


if __name__ == "__main__":
    embed_size, hidden_size, vocab_size = 32, 32, 128
    batch, seq_len = 2, 9   # captions length 9 -> LSTM sees T = 1 + 8 = 9 steps

    key = jax.random.PRNGKey(0)
    k_par, k_feat, k_cap = jax.random.split(key, 3)
    params = init_params(k_par, embed_size, hidden_size, vocab_size)

    features = jax.random.normal(k_feat, (batch, embed_size), jnp.float32)
    captions = jax.random.randint(k_cap, (batch, seq_len), 0, vocab_size, jnp.int32)

    ref = decoder_rnn_reference(params, features, captions)

    # f32 path: tight tolerance.
    out = jax.block_until_ready(
        decoder_rnn_forward(params, features, captions, matmul_dtype=jnp.float32))
    assert out.shape == (batch, seq_len, vocab_size)
    assert jnp.allclose(out, ref, atol=1e-4, rtol=1e-4), "f32 mismatch vs reference"

    # bf16-storage / f32-accumulation path: looser tolerance.
    out_bf16 = jax.block_until_ready(
        decoder_rnn_forward(params, features, captions, matmul_dtype=jnp.bfloat16))
    assert jnp.allclose(out_bf16, ref, atol=3e-2, rtol=3e-2), "bf16 mismatch vs reference"

    print("KERNEL_OK")
</pallas_src>

<mosaic_0001>
module attributes {stable_mosaic.version = 11 : i64} {
  func.func @_lstm_kernel(%arg0: i32, %arg1: memref<64x32xf32, #tpu.memory_space<vmem>>, %arg2: memref<32x512xf32, #tpu.memory_space<vmem>>, %arg3: memref<128x512xf32, #tpu.memory_space<vmem>>, %arg4: memref<1x512xf32, #tpu.memory_space<vmem>>, %arg5: memref<64x128xf32, #tpu.memory_space<vmem>>, %arg6: memref<64x512xf32, #tpu.memory_space<vmem>>, %arg7: memref<8x128xf32, #tpu.memory_space<vmem>>, %arg8: memref<8x128xf32, #tpu.memory_space<vmem>>) attributes {dimension_semantics = [#tpu.dimension_semantics<arbitrary>], iteration_bounds = array<i64: 2>, scalar_prefetch = 0 : i64, scratch_operands = 3 : i64, tpu.core_type = #tpu.core_type<tc>, window_params = [{transform_indices = @transform_0, window_bounds = array<i64: 64, 32>}, {pipeline_mode = #tpu.pipeline_mode<synchronous>, transform_indices = @transform_1, window_bounds = array<i64: 32, 512>}, {pipeline_mode = #tpu.pipeline_mode<synchronous>, transform_indices = @transform_2, window_bounds = array<i64: 128, 512>}, {pipeline_mode = #tpu.pipeline_mode<synchronous>, transform_indices = @transform_3, window_bounds = array<i64: 1, 512>}, {transform_indices = @transform_4, window_bounds = array<i64: 64, 128>}]} {
    %c0_i32 = arith.constant 0 : i32
    %0 = arith.cmpi eq, %arg0, %c0_i32 : i32
    %1 = arith.extui %0 : i1 to i32
    %c0_i32_0 = arith.constant 0 : i32
    %2 = arith.cmpi ne, %1, %c0_i32_0 : i32
    scf.if %2 {
      %cst_75 = arith.constant 0.000000e+00 : f32
      %279 = vector.broadcast %cst_75 : f32 to vector<8x128xf32>
      %c0_76 = arith.constant 0 : index
      %c0_77 = arith.constant 0 : index
      %280 = vector.load %arg7[%c0_76, %c0_77] : memref<8x128xf32, #tpu.memory_space<vmem>>, vector<8x128xf32>
      tpu.vector_store %arg7[%c0_76, %c0_77], %279 {strides = array<i32>} : memref<8x128xf32, #tpu.memory_space<vmem>>, vector<8x128xf32>,
      %cst_78 = arith.constant 0.000000e+00 : f32
      %281 = vector.broadcast %cst_78 : f32 to vector<8x128xf32>
      %c0_79 = arith.constant 0 : index
      %c0_80 = arith.constant 0 : index
      %282 = vector.load %arg8[%c0_79, %c0_80] : memref<8x128xf32, #tpu.memory_space<vmem>>, vector<8x128xf32>
      tpu.vector_store %arg8[%c0_79, %c0_80], %281 {strides = array<i32>} : memref<8x128xf32, #tpu.memory_space<vmem>>, vector<8x128xf32>,
    } else {
    }
    %c0 = arith.constant 0 : index
    %c0_1 = arith.constant 0 : index
    %3 = vector.load %arg1[%c0, %c0_1] : memref<64x32xf32, #tpu.memory_space<vmem>>, vector<64x32xf32>
    %c0_2 = arith.constant 0 : index
    %c0_3 = arith.constant 0 : index
    %4 = vector.load %arg2[%c0_2, %c0_3] : memref<32x512xf32, #tpu.memory_space<vmem>>, vector<32x512xf32>
    %cst = arith.constant dense<0.000000e+00> : vector<64x512xf32>
    %5 = tpu.matmul %3, %4, %cst {dimension_numbers = #tpu.dot_dimension_numbers<[1], [0], [0], [1], [0, 0, 1, 1], [], []>} : vector<64x32xf32>, vector<32x512xf32>, vector<64x512xf32> -> vector<64x512xf32>
    %c0_4 = arith.constant 0 : index
    %c0_5 = arith.constant 0 : index
    %6 = vector.load %arg4[%c0_4, %c0_5] : memref<1x512xf32, #tpu.memory_space<vmem>>, vector<1x512xf32>
    %7 = vector.broadcast %6 : vector<1x512xf32> to vector<64x512xf32>
    %8 = arith.addf %5, %7 : vector<64x512xf32>
    %c0_6 = arith.constant 0 : index
    %c0_7 = arith.constant 0 : index
    %9 = vector.load %arg6[%c0_6, %c0_7] : memref<64x512xf32, #tpu.memory_space<vmem>>, vector<64x512xf32>
    tpu.vector_store %arg6[%c0_6, %c0_7], %8 {strides = array<i32>} : memref<64x512xf32, #tpu.memory_space<vmem>>, vector<64x512xf32>,
    %c0_8 = arith.constant 0 : index
    %c0_9 = arith.constant 0 : index
    %10 = vector.load %arg3[%c0_8, %c0_9] : memref<128x512xf32, #tpu.memory_space<vmem>>, vector<128x512xf32>
    %c0_10 = arith.constant 0 : index
    %c0_11 = arith.constant 0 : index
    %11 = vector.load %arg7[%c0_10, %c0_11] : memref<8x128xf32, #tpu.memory_space<vmem>>, vector<8x128xf32>
    %c0_12 = arith.constant 0 : index
    %c0_13 = arith.constant 0 : index
    %12 = vector.load %arg8[%c0_12, %c0_13] : memref<8x128xf32, #tpu.memory_space<vmem>>, vector<8x128xf32>
    %c0_i32_14 = arith.constant 0 : i32
    %c8_i32 = arith.constant 8 : i32
    %13 = arith.muli %c0_i32_14, %c8_i32 : i32
    %14 = tpu.assume_multiple %13, 8 : i32
    %15 = arith.index_cast %14 : i32 to index
    %c0_15 = arith.constant 0 : index
    %16 = vector.load %arg6[%15, %c0_15] : memref<64x512xf32, #tpu.memory_space<vmem>>, vector<8x512xf32>
    %cst_16 = arith.constant dense<0.000000e+00> : vector<8x512xf32>
    %17 = tpu.matmul %11, %10, %cst_16 {dimension_numbers = #tpu.dot_dimension_numbers<[1], [0], [0], [1], [0, 0, 1, 1], [], []>} : vector<8x128xf32>, vector<128x512xf32>, vector<8x512xf32> -> vector<8x512xf32>
    %18 = arith.addf %16, %17 : vector<8x512xf32>
    %19 = vector.extract_strided_slice %18 {offsets = [0, 0], sizes = [8, 128], strides = [1, 1]} : vector<8x512xf32> to vector<8x128xf32>
    %20 = arith.negf %19 : vector<8x128xf32>
    %21 = math.exp %20 : vector<8x128xf32>
    %cst_17 = arith.constant 1.000000e+00 : f32
    %22 = vector.broadcast %cst_17 : f32 to vector<8x128xf32>
    %23 = arith.addf %22, %21 : vector<8x128xf32>
    %24 = arith.divf %22, %23 : vector<8x128xf32>
    %25 = vector.extract_strided_slice %18 {offsets = [0, 128], sizes = [8, 128], strides = [1, 1]} : vector<8x512xf32> to vector<8x128xf32>
    %26 = arith.negf %25 : vector<8x128xf32>
    %27 = math.exp %26 : vector<8x128xf32>
    %cst_18 = arith.constant 1.000000e+00 : f32
    %28 = vector.broadcast %cst_18 : f32 to vector<8x128xf32>
    %29 = arith.addf %28, %27 : vector<8x128xf32>
    %30 = arith.divf %28, %29 : vector<8x128xf32>
    %31 = vector.extract_strided_slice %18 {offsets = [0, 256], sizes = [8, 128], strides = [1, 1]} : vector<8x512xf32> to vector<8x128xf32>
    %32 = math.tanh %31 : vector<8x128xf32>
    %33 = vector.extract_strided_slice %18 {offsets = [0, 384], sizes = [8, 128], strides = [1, 1]} : vector<8x512xf32> to vector<8x128xf32>
    %34 = arith.negf %33 : vector<8x128xf32>
    %35 = math.exp %34 : vector<8x128xf32>
    %cst_19 = arith.constant 1.000000e+00 : f32
    %36 = vector.broadcast %cst_19 : f32 to vector<8x128xf32>
    %37 = arith.addf %36, %35 : vector<8x128xf32>
    %38 = arith.divf %36, %37 : vector<8x128xf32>
    %39 = arith.mulf %30, %12 : vector<8x128xf32>
    %40 = arith.mulf %24, %32 : vector<8x128xf32>
    %41 = arith.addf %39, %40 : vector<8x128xf32>
    %42 = math.tanh %41 : vector<8x128xf32>
    %43 = arith.mulf %38, %42 : vector<8x128xf32>
    %44 = arith.index_cast %14 : i32 to index
    %c0_20 = arith.constant 0 : index
    %45 = vector.load %arg5[%44, %c0_20] : memref<64x128xf32, #tpu.memory_space<vmem>>, vector<8x128xf32>
    tpu.vector_store %arg5[%44, %c0_20], %43 {strides = array<i32>} : memref<64x128xf32, #tpu.memory_space<vmem>>, vector<8x128xf32>,
    %c1_i32 = arith.constant 1 : i32
    %c8_i32_21 = arith.constant 8 : i32
    %46 = arith.muli %c1_i32, %c8_i32_21 : i32
    %47 = tpu.assume_multiple %46, 8 : i32
    %48 = arith.index_cast %47 : i32 to index
    %c0_22 = arith.constant 0 : index
    %49 = vector.load %arg6[%48, %c0_22] : memref<64x512xf32, #tpu.memory_space<vmem>>, vector<8x512xf32>
    %cst_23 = arith.constant dense<0.000000e+00> : vector<8x512xf32>
    %50 = tpu.matmul %43, %10, %cst_23 {dimension_numbers = #tpu.dot_dimension_numbers<[1], [0], [0], [1], [0, 0, 1, 1], [], []>} : vector<8x128xf32>, vector<128x512xf32>, vector<8x512xf32> -> vector<8x512xf32>
    %51 = arith.addf %49, %50 : vector<8x512xf32>
    %52 = vector.extract_strided_slice %51 {offsets = [0, 0], sizes = [8, 128], strides = [1, 1]} : vector<8x512xf32> to vector<8x128xf32>
    %53 = arith.negf %52 : vector<8x128xf32>
    %54 = math.exp %53 : vector<8x128xf32>
    %cst_24 = arith.constant 1.000000e+00 : f32
    %55 = vector.broadcast %cst_24 : f32 to vector<8x128xf32>
    %56 = arith.addf %55, %54 : vector<8x128xf32>
    %57 = arith.divf %55, %56 : vector<8x128xf32>
    %58 = vector.extract_strided_slice %51 {offsets = [0, 128], sizes = [8, 128], strides = [1, 1]} : vector<8x512xf32> to vector<8x128xf32>
    %59 = arith.negf %58 : vector<8x128xf32>
    %60 = math.exp %59 : vector<8x128xf32>
    %cst_25 = arith.constant 1.000000e+00 : f32
    %61 = vector.broadcast %cst_25 : f32 to vector<8x128xf32>
    %62 = arith.addf %61, %60 : vector<8x128xf32>
    %63 = arith.divf %61, %62 : vector<8x128xf32>
    %64 = vector.extract_strided_slice %51 {offsets = [0, 256], sizes = [8, 128], strides = [1, 1]} : vector<8x512xf32> to vector<8x128xf32>
    %65 = math.tanh %64 : vector<8x128xf32>
    %66 = vector.extract_strided_slice %51 {offsets = [0, 384], sizes = [8, 128], strides = [1, 1]} : vector<8x512xf32> to vector<8x128xf32>
    %67 = arith.negf %66 : vector<8x128xf32>
    %68 = math.exp %67 : vector<8x128xf32>
    %cst_26 = arith.constant 1.000000e+00 : f32
    %69 = vector.broadcast %cst_26 : f32 to vector<8x128xf32>
    %70 = arith.addf %69, %68 : vector<8x128xf32>
    %71 = arith.divf %69, %70 : vector<8x128xf32>
    %72 = arith.mulf %63, %41 : vector<8x128xf32>
    %73 = arith.mulf %57, %65 : vector<8x128xf32>
    %74 = arith.addf %72, %73 : vector<8x128xf32>
    %75 = math.tanh %74 : vector<8x128xf32>
    %76 = arith.mulf %71, %75 : vector<8x128xf32>
    %77 = arith.index_cast %47 : i32 to index
    %c0_27 = arith.constant 0 : index
    %78 = vector.load %arg5[%77, %c0_27] : memref<64x128xf32, #tpu.memory_space<vmem>>, vector<8x128xf32>
    tpu.vector_store %arg5[%77, %c0_27], %76 {strides = array<i32>} : memref<64x128xf32, #tpu.memory_space<vmem>>, vector<8x128xf32>,
    %c2_i32 = arith.constant 2 : i32
    %c8_i32_28 = arith.constant 8 : i32
    %79 = arith.muli %c2_i32, %c8_i32_28 : i32
    %80 = tpu.assume_multiple %79, 8 : i32
    %81 = arith.index_cast %80 : i32 to index
    %c0_29 = arith.constant 0 : index
    %82 = vector.load %arg6[%81, %c0_29] : memref<64x512xf32, #tpu.memory_space<vmem>>, vector<8x512xf32>
    %cst_30 = arith.constant dense<0.000000e+00> : vector<8x512xf32>
    %83 = tpu.matmul %76, %10, %cst_30 {dimension_numbers = #tpu.dot_dimension_numbers<[1], [0], [0], [1], [0, 0, 1, 1], [], []>} : vector<8x128xf32>, vector<128x512xf32>, vector<8x512xf32> -> vector<8x512xf32>
    %84 = arith.addf %82, %83 : vector<8x512xf32>
    %85 = vector.extract_strided_slice %84 {offsets = [0, 0], sizes = [8, 128], strides = [1, 1]} : vector<8x512xf32> to vector<8x128xf32>
    %86 = arith.negf %85 : vector<8x128xf32>
    %87 = math.exp %86 : vector<8x128xf32>
    %cst_31 = arith.constant 1.000000e+00 : f32
    %88 = vector.broadcast %cst_31 : f32 to vector<8x128xf32>
    %89 = arith.addf %88, %87 : vector<8x128xf32>
    %90 = arith.divf %88, %89 : vector<8x128xf32>
    %91 = vector.extract_strided_slice %84 {offsets = [0, 128], sizes = [8, 128], strides = [1, 1]} : vector<8x512xf32> to vector<8x128xf32>
    %92 = arith.negf %91 : vector<8x128xf32>
    %93 = math.exp %92 : vector<8x128xf32>
    %cst_32 = arith.constant 1.000000e+00 : f32
    %94 = vector.broadcast %cst_32 : f32 to vector<8x128xf32>
    %95 = arith.addf %94, %93 : vector<8x128xf32>
    %96 = arith.divf %94, %95 : vector<8x128xf32>
    %97 = vector.extract_strided_slice %84 {offsets = [0, 256], sizes = [8, 128], strides = [1, 1]} : vector<8x512xf32> to vector<8x128xf32>
    %98 = math.tanh %97 : vector<8x128xf32>
    %99 = vector.extract_strided_slice %84 {offsets = [0, 384], sizes = [8, 128], strides = [1, 1]} : vector<8x512xf32> to vector<8x128xf32>
    %100 = arith.negf %99 : vector<8x128xf32>
    %101 = math.exp %100 : vector<8x128xf32>
    %cst_33 = arith.constant 1.000000e+00 : f32
    %102 = vector.broadcast %cst_33 : f32 to vector<8x128xf32>
    %103 = arith.addf %102, %101 : vector<8x128xf32>
    %104 = arith.divf %102, %103 : vector<8x128xf32>
    %105 = arith.mulf %96, %74 : vector<8x128xf32>
    %106 = arith.mulf %90, %98 : vector<8x128xf32>
    %107 = arith.addf %105, %106 : vector<8x128xf32>
    %108 = math.tanh %107 : vector<8x128xf32>
    %109 = arith.mulf %104, %108 : vector<8x128xf32>
    %110 = arith.index_cast %80 : i32 to index
    %c0_34 = arith.constant 0 : index
    %111 = vector.load %arg5[%110, %c0_34] : memref<64x128xf32, #tpu.memory_space<vmem>>, vector<8x128xf32>
    tpu.vector_store %arg5[%110, %c0_34], %109 {strides = array<i32>} : memref<64x128xf32, #tpu.memory_space<vmem>>, vector<8x128xf32>,
    %c3_i32 = arith.constant 3 : i32
    %c8_i32_35 = arith.constant 8 : i32
    %112 = arith.muli %c3_i32, %c8_i32_35 : i32
    %113 = tpu.assume_multiple %112, 8 : i32
    %114 = arith.index_cast %113 : i32 to index
    %c0_36 = arith.constant 0 : index
    %115 = vector.load %arg6[%114, %c0_36] : memref<64x512xf32, #tpu.memory_space<vmem>>, vector<8x512xf32>
    %cst_37 = arith.constant dense<0.000000e+00> : vector<8x512xf32>
    %116 = tpu.matmul %109, %10, %cst_37 {dimension_numbers = #tpu.dot_dimension_numbers<[1], [0], [0], [1], [0, 0, 1, 1], [], []>} : vector<8x128xf32>, vector<128x512xf32>, vector<8x512xf32> -> vector<8x512xf32>
    %117 = arith.addf %115, %116 : vector<8x512xf32>
    %118 = vector.extract_strided_slice %117 {offsets = [0, 0], sizes = [8, 128], strides = [1, 1]} : vector<8x512xf32> to vector<8x128xf32>
    %119 = arith.negf %118 : vector<8x128xf32>
    %120 = math.exp %119 : vector<8x128xf32>
    %cst_38 = arith.constant 1.000000e+00 : f32
    %121 = vector.broadcast %cst_38 : f32 to vector<8x128xf32>
    %122 = arith.addf %121, %120 : vector<8x128xf32>
    %123 = arith.divf %121, %122 : vector<8x128xf32>
    %124 = vector.extract_strided_slice %117 {offsets = [0, 128], sizes = [8, 128], strides = [1, 1]} : vector<8x512xf32> to vector<8x128xf32>
    %125 = arith.negf %124 : vector<8x128xf32>
    %126 = math.exp %125 : vector<8x128xf32>
    %cst_39 = arith.constant 1.000000e+00 : f32
    %127 = vector.broadcast %cst_39 : f32 to vector<8x128xf32>
    %128 = arith.addf %127, %126 : vector<8x128xf32>
    %129 = arith.divf %127, %128 : vector<8x128xf32>
    %130 = vector.extract_strided_slice %117 {offsets = [0, 256], sizes = [8, 128], strides = [1, 1]} : vector<8x512xf32> to vector<8x128xf32>
    %131 = math.tanh %130 : vector<8x128xf32>
    %132 = vector.extract_strided_slice %117 {offsets = [0, 384], sizes = [8, 128], strides = [1, 1]} : vector<8x512xf32> to vector<8x128xf32>
    %133 = arith.negf %132 : vector<8x128xf32>
    %134 = math.exp %133 : vector<8x128xf32>
    %cst_40 = arith.constant 1.000000e+00 : f32
    %135 = vector.broadcast %cst_40 : f32 to vector<8x128xf32>
    %136 = arith.addf %135, %134 : vector<8x128xf32>
    %137 = arith.divf %135, %136 : vector<8x128xf32>
    %138 = arith.mulf %129, %107 : vector<8x128xf32>
    %139 = arith.mulf %123, %131 : vector<8x128xf32>
    %140 = arith.addf %138, %139 : vector<8x128xf32>
    %141 = math.tanh %140 : vector<8x128xf32>
    %142 = arith.mulf %137, %141 : vector<8x128xf32>
    %143 = arith.index_cast %113 : i32 to index
    %c0_41 = arith.constant 0 : index
    %144 = vector.load %arg5[%143, %c0_41] : memref<64x128xf32, #tpu.memory_space<vmem>>, vector<8x128xf32>
    tpu.vector_store %arg5[%143, %c0_41], %142 {strides = array<i32>} : memref<64x128xf32, #tpu.memory_space<vmem>>, vector<8x128xf32>,
    %c4_i32 = arith.constant 4 : i32
    %c8_i32_42 = arith.constant 8 : i32
    %145 = arith.muli %c4_i32, %c8_i32_42 : i32
    %146 = tpu.assume_multiple %145, 8 : i32
    %147 = arith.index_cast %146 : i32 to index
    %c0_43 = arith.constant 0 : index
    %148 = vector.load %arg6[%147, %c0_43] : memref<64x512xf32, #tpu.memory_space<vmem>>, vector<8x512xf32>
    %cst_44 = arith.constant dense<0.000000e+00> : vector<8x512xf32>
    %149 = tpu.matmul %142, %10, %cst_44 {dimension_numbers = #tpu.dot_dimension_numbers<[1], [0], [0], [1], [0, 0, 1, 1], [], []>} : vector<8x128xf32>, vector<128x512xf32>, vector<8x512xf32> -> vector<8x512xf32>
    %150 = arith.addf %148, %149 : vector<8x512xf32>
    %151 = vector.extract_strided_slice %150 {offsets = [0, 0], sizes = [8, 128], strides = [1, 1]} : vector<8x512xf32> to vector<8x128xf32>
    %152 = arith.negf %151 : vector<8x128xf32>
    %153 = math.exp %152 : vector<8x128xf32>
    %cst_45 = arith.constant 1.000000e+00 : f32
    %154 = vector.broadcast %cst_45 : f32 to vector<8x128xf32>
    %155 = arith.addf %154, %153 : vector<8x128xf32>
    %156 = arith.divf %154, %155 : vector<8x128xf32>
    %157 = vector.extract_strided_slice %150 {offsets = [0, 128], sizes = [8, 128], strides = [1, 1]} : vector<8x512xf32> to vector<8x128xf32>
    %158 = arith.negf %157 : vector<8x128xf32>
    %159 = math.exp %158 : vector<8x128xf32>
    %cst_46 = arith.constant 1.000000e+00 : f32
    %160 = vector.broadcast %cst_46 : f32 to vector<8x128xf32>
    %161 = arith.addf %160, %159 : vector<8x128xf32>
    %162 = arith.divf %160, %161 : vector<8x128xf32>
    %163 = vector.extract_strided_slice %150 {offsets = [0, 256], sizes = [8, 128], strides = [1, 1]} : vector<8x512xf32> to vector<8x128xf32>
    %164 = math.tanh %163 : vector<8x128xf32>
    %165 = vector.extract_strided_slice %150 {offsets = [0, 384], sizes = [8, 128], strides = [1, 1]} : vector<8x512xf32> to vector<8x128xf32>
    %166 = arith.negf %165 : vector<8x128xf32>
    %167 = math.exp %166 : vector<8x128xf32>
    %cst_47 = arith.constant 1.000000e+00 : f32
    %168 = vector.broadcast %cst_47 : f32 to vector<8x128xf32>
    %169 = arith.addf %168, %167 : vector<8x128xf32>
    %170 = arith.divf %168, %169 : vector<8x128xf32>
    %171 = arith.mulf %162, %140 : vector<8x128xf32>
    %172 = arith.mulf %156, %164 : vector<8x128xf32>
    %173 = arith.addf %171, %172 : vector<8x128xf32>
    %174 = math.tanh %173 : vector<8x128xf32>
    %175 = arith.mulf %170, %174 : vector<8x128xf32>
    %176 = arith.index_cast %146 : i32 to index
    %c0_48 = arith.constant 0 : index
    %177 = vector.load %arg5[%176, %c0_48] : memref<64x128xf32, #tpu.memory_space<vmem>>, vector<8x128xf32>
    tpu.vector_store %arg5[%176, %c0_48], %175 {strides = array<i32>} : memref<64x128xf32, #tpu.memory_space<vmem>>, vector<8x128xf32>,
    %c5_i32 = arith.constant 5 : i32
    %c8_i32_49 = arith.constant 8 : i32
    %178 = arith.muli %c5_i32, %c8_i32_49 : i32
    %179 = tpu.assume_multiple %178, 8 : i32
    %180 = arith.index_cast %179 : i32 to index
    %c0_50 = arith.constant 0 : index
    %181 = vector.load %arg6[%180, %c0_50] : memref<64x512xf32, #tpu.memory_space<vmem>>, vector<8x512xf32>
    %cst_51 = arith.constant dense<0.000000e+00> : vector<8x512xf32>
    %182 = tpu.matmul %175, %10, %cst_51 {dimension_numbers = #tpu.dot_dimension_numbers<[1], [0], [0], [1], [0, 0, 1, 1], [], []>} : vector<8x128xf32>, vector<128x512xf32>, vector<8x512xf32> -> vector<8x512xf32>
    %183 = arith.addf %181, %182 : vector<8x512xf32>
    %184 = vector.extract_strided_slice %183 {offsets = [0, 0], sizes = [8, 128], strides = [1, 1]} : vector<8x512xf32> to vector<8x128xf32>
    %185 = arith.negf %184 : vector<8x128xf32>
    %186 = math.exp %185 : vector<8x128xf32>
    %cst_52 = arith.constant 1.000000e+00 : f32
    %187 = vector.broadcast %cst_52 : f32 to vector<8x128xf32>
    %188 = arith.addf %187, %186 : vector<8x128xf32>
    %189 = arith.divf %187, %188 : vector<8x128xf32>
    %190 = vector.extract_strided_slice %183 {offsets = [0, 128], sizes = [8, 128], strides = [1, 1]} : vector<8x512xf32> to vector<8x128xf32>
    %191 = arith.negf %190 : vector<8x128xf32>
    %192 = math.exp %191 : vector<8x128xf32>
    %cst_53 = arith.constant 1.000000e+00 : f32
    %193 = vector.broadcast %cst_53 : f32 to vector<8x128xf32>
    %194 = arith.addf %193, %192 : vector<8x128xf32>
    %195 = arith.divf %193, %194 : vector<8x128xf32>
    %196 = vector.extract_strided_slice %183 {offsets = [0, 256], sizes = [8, 128], strides = [1, 1]} : vector<8x512xf32> to vector<8x128xf32>
    %197 = math.tanh %196 : vector<8x128xf32>
    %198 = vector.extract_strided_slice %183 {offsets = [0, 384], sizes = [8, 128], strides = [1, 1]} : vector<8x512xf32> to vector<8x128xf32>
    %199 = arith.negf %198 : vector<8x128xf32>
    %200 = math.exp %199 : vector<8x128xf32>
    %cst_54 = arith.constant 1.000000e+00 : f32
    %201 = vector.broadcast %cst_54 : f32 to vector<8x128xf32>
    %202 = arith.addf %201, %200 : vector<8x128xf32>
    %203 = arith.divf %201, %202 : vector<8x128xf32>
    %204 = arith.mulf %195, %173 : vector<8x128xf32>
    %205 = arith.mulf %189, %197 : vector<8x128xf32>
    %206 = arith.addf %204, %205 : vector<8x128xf32>
    %207 = math.tanh %206 : vector<8x128xf32>
    %208 = arith.mulf %203, %207 : vector<8x128xf32>
    %209 = arith.index_cast %179 : i32 to index
    %c0_55 = arith.constant 0 : index
    %210 = vector.load %arg5[%209, %c0_55] : memref<64x128xf32, #tpu.memory_space<vmem>>, vector<8x128xf32>
    tpu.vector_store %arg5[%209, %c0_55], %208 {strides = array<i32>} : memref<64x128xf32, #tpu.memory_space<vmem>>, vector<8x128xf32>,
    %c6_i32 = arith.constant 6 : i32
    %c8_i32_56 = arith.constant 8 : i32
    %211 = arith.muli %c6_i32, %c8_i32_56 : i32
    %212 = tpu.assume_multiple %211, 8 : i32
    %213 = arith.index_cast %212 : i32 to index
    %c0_57 = arith.constant 0 : index
    %214 = vector.load %arg6[%213, %c0_57] : memref<64x512xf32, #tpu.memory_space<vmem>>, vector<8x512xf32>
    %cst_58 = arith.constant dense<0.000000e+00> : vector<8x512xf32>
    %215 = tpu.matmul %208, %10, %cst_58 {dimension_numbers = #tpu.dot_dimension_numbers<[1], [0], [0], [1], [0, 0, 1, 1], [], []>} : vector<8x128xf32>, vector<128x512xf32>, vector<8x512xf32> -> vector<8x512xf32>
    %216 = arith.addf %214, %215 : vector<8x512xf32>
    %217 = vector.extract_strided_slice %216 {offsets = [0, 0], sizes = [8, 128], strides = [1, 1]} : vector<8x512xf32> to vector<8x128xf32>
    %218 = arith.negf %217 : vector<8x128xf32>
    %219 = math.exp %218 : vector<8x128xf32>
    %cst_59 = arith.constant 1.000000e+00 : f32
    %220 = vector.broadcast %cst_59 : f32 to vector<8x128xf32>
    %221 = arith.addf %220, %219 : vector<8x128xf32>
    %222 = arith.divf %220, %221 : vector<8x128xf32>
    %223 = vector.extract_strided_slice %216 {offsets = [0, 128], sizes = [8, 128], strides = [1, 1]} : vector<8x512xf32> to vector<8x128xf32>
    %224 = arith.negf %223 : vector<8x128xf32>
    %225 = math.exp %224 : vector<8x128xf32>
    %cst_60 = arith.constant 1.000000e+00 : f32
    %226 = vector.broadcast %cst_60 : f32 to vector<8x128xf32>
    %227 = arith.addf %226, %225 : vector<8x128xf32>
    %228 = arith.divf %226, %227 : vector<8x128xf32>
    %229 = vector.extract_strided_slice %216 {offsets = [0, 256], sizes = [8, 128], strides = [1, 1]} : vector<8x512xf32> to vector<8x128xf32>
    %230 = math.tanh %229 : vector<8x128xf32>
    %231 = vector.extract_strided_slice %216 {offsets = [0, 384], sizes = [8, 128], strides = [1, 1]} : vector<8x512xf32> to vector<8x128xf32>
    %232 = arith.negf %231 : vector<8x128xf32>
    %233 = math.exp %232 : vector<8x128xf32>
    %cst_61 = arith.constant 1.000000e+00 : f32
    %234 = vector.broadcast %cst_61 : f32 to vector<8x128xf32>
    %235 = arith.addf %234, %233 : vector<8x128xf32>
    %236 = arith.divf %234, %235 : vector<8x128xf32>
    %237 = arith.mulf %228, %206 : vector<8x128xf32>
    %238 = arith.mulf %222, %230 : vector<8x128xf32>
    %239 = arith.addf %237, %238 : vector<8x128xf32>
    %240 = math.tanh %239 : vector<8x128xf32>
    %241 = arith.mulf %236, %240 : vector<8x128xf32>
    %242 = arith.index_cast %212 : i32 to index
    %c0_62 = arith.constant 0 : index
    %243 = vector.load %arg5[%242, %c0_62] : memref<64x128xf32, #tpu.memory_space<vmem>>, vector<8x128xf32>
    tpu.vector_store %arg5[%242, %c0_62], %241 {strides = array<i32>} : memref<64x128xf32, #tpu.memory_space<vmem>>, vector<8x128xf32>,
    %c7_i32 = arith.constant 7 : i32
    %c8_i32_63 = arith.constant 8 : i32
    %244 = arith.muli %c7_i32, %c8_i32_63 : i32
    %245 = tpu.assume_multiple %244, 8 : i32
    %246 = arith.index_cast %245 : i32 to index
    %c0_64 = arith.constant 0 : index
    %247 = vector.load %arg6[%246, %c0_64] : memref<64x512xf32, #tpu.memory_space<vmem>>, vector<8x512xf32>
    %cst_65 = arith.constant dense<0.000000e+00> : vector<8x512xf32>
    %248 = tpu.matmul %241, %10, %cst_65 {dimension_numbers = #tpu.dot_dimension_numbers<[1], [0], [0], [1], [0, 0, 1, 1], [], []>} : vector<8x128xf32>, vector<128x512xf32>, vector<8x512xf32> -> vector<8x512xf32>
    %249 = arith.addf %247, %248 : vector<8x512xf32>
    %250 = vector.extract_strided_slice %249 {offsets = [0, 0], sizes = [8, 128], strides = [1, 1]} : vector<8x512xf32> to vector<8x128xf32>
    %251 = arith.negf %250 : vector<8x128xf32>
    %252 = math.exp %251 : vector<8x128xf32>
    %cst_66 = arith.constant 1.000000e+00 : f32
    %253 = vector.broadcast %cst_66 : f32 to vector<8x128xf32>
    %254 = arith.addf %253, %252 : vector<8x128xf32>
    %255 = arith.divf %253, %254 : vector<8x128xf32>
    %256 = vector.extract_strided_slice %249 {offsets = [0, 128], sizes = [8, 128], strides = [1, 1]} : vector<8x512xf32> to vector<8x128xf32>
    %257 = arith.negf %256 : vector<8x128xf32>
    %258 = math.exp %257 : vector<8x128xf32>
    %cst_67 = arith.constant 1.000000e+00 : f32
    %259 = vector.broadcast %cst_67 : f32 to vector<8x128xf32>
    %260 = arith.addf %259, %258 : vector<8x128xf32>
    %261 = arith.divf %259, %260 : vector<8x128xf32>
    %262 = vector.extract_strided_slice %249 {offsets = [0, 256], sizes = [8, 128], strides = [1, 1]} : vector<8x512xf32> to vector<8x128xf32>
    %263 = math.tanh %262 : vector<8x128xf32>
    %264 = vector.extract_strided_slice %249 {offsets = [0, 384], sizes = [8, 128], strides = [1, 1]} : vector<8x512xf32> to vector<8x128xf32>
    %265 = arith.negf %264 : vector<8x128xf32>
    %266 = math.exp %265 : vector<8x128xf32>
    %cst_68 = arith.constant 1.000000e+00 : f32
    %267 = vector.broadcast %cst_68 : f32 to vector<8x128xf32>
    %268 = arith.addf %267, %266 : vector<8x128xf32>
    %269 = arith.divf %267, %268 : vector<8x128xf32>
    %270 = arith.mulf %261, %239 : vector<8x128xf32>
    %271 = arith.mulf %255, %263 : vector<8x128xf32>
    %272 = arith.addf %270, %271 : vector<8x128xf32>
    %273 = math.tanh %272 : vector<8x128xf32>
    %274 = arith.mulf %269, %273 : vector<8x128xf32>
    %275 = arith.index_cast %245 : i32 to index
    %c0_69 = arith.constant 0 : index
    %276 = vector.load %arg5[%275, %c0_69] : memref<64x128xf32, #tpu.memory_space<vmem>>, vector<8x128xf32>
    tpu.vector_store %arg5[%275, %c0_69], %274 {strides = array<i32>} : memref<64x128xf32, #tpu.memory_space<vmem>>, vector<8x128xf32>,
    %c8_i32_70 = arith.constant 8 : i32
    %c0_71 = arith.constant 0 : index
    %c0_72 = arith.constant 0 : index
    %277 = vector.load %arg7[%c0_71, %c0_72] : memref<8x128xf32, #tpu.memory_space<vmem>>, vector<8x128xf32>
    tpu.vector_store %arg7[%c0_71, %c0_72], %274 {strides = array<i32>} : memref<8x128xf32, #tpu.memory_space<vmem>>, vector<8x128xf32>,
    %c0_73 = arith.constant 0 : index
    %c0_74 = arith.constant 0 : index
    %278 = vector.load %arg8[%c0_73, %c0_74] : memref<8x128xf32, #tpu.memory_space<vmem>>, vector<8x128xf32>
    tpu.vector_store %arg8[%c0_73, %c0_74], %272 {strides = array<i32>} : memref<8x128xf32, #tpu.memory_space<vmem>>, vector<8x128xf32>,
    return
  }
  func.func @transform_0(%arg0: i32) -> (i32, i32) {
    %c0_i32 = arith.constant 0 : i32
    %c0_i32_0 = arith.constant 0 : i32
    return %arg0, %c0_i32 : i32, i32
  }
  func.func @transform_1(%arg0: i32) -> (i32, i32) {
    %c0_i32 = arith.constant 0 : i32
    %c0_i32_0 = arith.constant 0 : i32
    %c0_i32_1 = arith.constant 0 : i32
    return %c0_i32, %c0_i32_0 : i32, i32
  }
  func.func @transform_2(%arg0: i32) -> (i32, i32) {
    %c0_i32 = arith.constant 0 : i32
    %c0_i32_0 = arith.constant 0 : i32
    %c0_i32_1 = arith.constant 0 : i32
    return %c0_i32, %c0_i32_0 : i32, i32
  }
  func.func @transform_3(%arg0: i32) -> (i32, i32) {
    %c0_i32 = arith.constant 0 : i32
    %c0_i32_0 = arith.constant 0 : i32
    %c0_i32_1 = arith.constant 0 : i32
    return %c0_i32, %c0_i32_0 : i32, i32
  }
  func.func @transform_4(%arg0: i32) -> (i32, i32) {
    %c0_i32 = arith.constant 0 : i32
    %c0_i32_0 = arith.constant 0 : i32
    return %arg0, %c0_i32 : i32, i32
  }
}

</mosaic_0001>

<llo_original>
// kernel: tpu_custom_call.1
$region0: #{tpu_custom_call.1}
  #allocation0 [shape = 'u32[]', space=smem, size = 0x4, offset = 0x4, fixed_abs, tag = 'smem constant byte address 0x4 - core index']
  #allocation1 [shape = 'u32[144,128]{1,0:T(1,128)}', space=vmem, size = 0x12000, scoped, tag = 'internal scratch']
  #allocation2 [shape = 'f32[64,512]{1,0:T(8,128)}', space=vmem, size = 0x20000, scoped, tag = 'scratch operand']
  #allocation3 [shape = 'f32[8,128]{1,0:T(8,128)}', space=vmem, size = 0x1000, scoped, tag = 'scratch operand']
  #allocation4 [shape = 'f32[8,128]{1,0:T(8,128)}', space=vmem, size = 0x1000, scoped, tag = 'scratch operand']
  %s0 = inlined_call_operand.vmem [shape: f32[128,32], index: 0, kind: input, shape index: {}]
  %s1 = inlined_call_operand.vmem [shape: f32[32,512], index: 1, kind: input, shape index: {}]
  %s2 = inlined_call_operand.hbm [shape: f32[128,512], index: 2, kind: input, shape index: {}]
  %s3 = inlined_call_operand.vmem [shape: f32[1,512], index: 3, kind: input, shape index: {}]
  %s4 = inlined_call_operand.hbm [shape: f32[128,128], index: 4, kind: output, shape index: {}]
  %s5 = sld [smem:[#allocation0]]
  $region57: #{tpu_custom_call.1} parent=0
    _
  %s7 = ssub.s32 1, %s5
  %s8 = scalar_select 0, %s7, %s5
  $region1: #{tpu_custom_call.1} parent=0
    #allocation5 [shape = 'u8[262144]{0}', space=vmem, size = 0x40000, scoped, tag = 'input window, operand 2, single buffered']
    #allocation6 [shape = 's32[2]{0}', space=sflag, size = 0x8, scoped, tag = 'scoped memory for tpu_custom_call.1']
    #allocation7 [shape = 's32[2]{0}', space=sflag, size = 0x8, scoped, tag = 'scoped memory for tpu_custom_call.1']
    #allocation8 [shape = 'u8[65536]{0}', space=vmem, size = 0x10000, scoped, tag = 'output window, operand 0']
    %9 = vsyncpa [#allocation6], 0
    %10 = vsyncpa [#allocation7], 0
    %s11 = scalar_lea.sflag [#allocation7], 1
    %12 = vsyncpa %s11, 0
    loop: start=0, step=1, limit=4
    $region2: #{tpu_custom_call.1} parent=1 // loop_pre_header
      _
    $region3: #{tpu_custom_call.1} parent=1 // loop_header
      %s14 = sphi 0, %s18
      %p15 = scmp.ge.s32.totalorder %s14, 4
      %s24 = sphi 0, %s26
      %s27 = sphi 0, %s24
      %s28 = sphi 0, %s27
      %s44 = sphi 0, %s28
      %s48 = sphi 0, %s48
      %s50 = sphi 0, %s48
      %s51 = sphi 0, %s50
      %s65 = sphi 0, %s51
      %s69 = sphi 0, %s69
      %s71 = sphi 0, %s69
      %s72 = sphi 0, %s71
      %s86 = sphi 0, %s72
      %s90 = sphi 0, %s90
      %s92 = sphi 0, %s90
      %s93 = sphi 0, %s92
      %s107 = sphi 0, %s93
      %s113 = sphi 0, %s115
      %s116 = sphi 0, %s113
      %s117 = sphi 0, %s116
      %s133 = sphi 0, %s117
    $region4: #{tpu_custom_call.1} parent=1 // loop_header_branch
      %17 = sbr.rel (%p15) target = $region8
    $region5: #{tpu_custom_call.1} parent=1 // loop_body
      %s19 = ssub.s32 %s14, 1
      %s20 = ssub.s32 %s14, 2
      %s21 = sadd.s32 %s14, 1
      %s22 = ssub.s32 %s14, %s21
      %p23 = scmp.eq.s32.totalorder %s22, 0
      %s25 = sadd.s32 %s24, 1
      %s26 = scalar_select %p23, %s24, %s25
      %p29 = pneg %p23
      %p30 = scmp.eq.s32.totalorder %s14, 1
      %p31 = por %p29, %p30
      %p32 = scmp.ne.s32.totalorder %s24, %s27
      %p33 = scmp.eq.s32.totalorder %s14, 0
      %p34 = por %p32, %p33
      %p35 = scmp.ne.s32.totalorder %s24, %s27
      %p36 = scmp.eq.s32.totalorder %s19, 1
      %p37 = por %p35, %p36
      %p38 = scmp.ne.s32.totalorder %s27, %s28
      %p39 = scmp.eq.s32.totalorder %s19, 0
      %p40 = por %p38, %p39
      %p41 = scmp.ne.s32.totalorder %s27, %s28
      %p42 = scmp.eq.s32.totalorder %s20, 1
      %p43 = por %p41, %p42
      %p45 = scmp.ne.s32.totalorder %s28, %s44
      %p46 = scmp.eq.s32.totalorder %s20, 0
      %p47 = por %p45, %p46
      %s49 = sadd.s32 %s48, 1
      %p52 = scmp.eq.s32.totalorder %s14, 1
      %p53 = scmp.ne.s32.totalorder %s48, %s50
      %p54 = scmp.eq.s32.totalorder %s14, 0
      %p55 = por %p53, %p54
      %p56 = scmp.ne.s32.totalorder %s48, %s50
      %p57 = scmp.eq.s32.totalorder %s19, 1
      %p58 = por %p56, %p57
      %p59 = scmp.ne.s32.totalorder %s50, %s51
      %p60 = scmp.eq.s32.totalorder %s19, 0
      %p61 = por %p59, %p60
      %p62 = scmp.ne.s32.totalorder %s50, %s51
      %p63 = scmp.eq.s32.totalorder %s20, 1
      %p64 = por %p62, %p63
      %p66 = scmp.ne.s32.totalorder %s51, %s65
      %p67 = scmp.eq.s32.totalorder %s20, 0
      %p68 = por %p66, %p67
      %s70 = sadd.s32 %s69, 1
      %p73 = scmp.eq.s32.totalorder %s14, 1
      %p74 = scmp.ne.s32.totalorder %s69, %s71
      %p75 = scmp.eq.s32.totalorder %s14, 0
      %p76 = por %p74, %p75
      %p77 = scmp.ne.s32.totalorder %s69, %s71
      %p78 = scmp.eq.s32.totalorder %s19, 1
      %p79 = por %p77, %p78
      %p80 = scmp.ne.s32.totalorder %s71, %s72
      %p81 = scmp.eq.s32.totalorder %s19, 0
      %p82 = por %p80, %p81
      %p83 = scmp.ne.s32.totalorder %s71, %s72
      %p84 = scmp.eq.s32.totalorder %s20, 1
      %p85 = por %p83, %p84
      %p87 = scmp.ne.s32.totalorder %s72, %s86
      %p88 = scmp.eq.s32.totalorder %s20, 0
      %p89 = por %p87, %p88
      %s91 = sadd.s32 %s90, 1
      %p94 = scmp.eq.s32.totalorder %s14, 1
      %p95 = scmp.ne.s32.totalorder %s90, %s92
      %p96 = scmp.eq.s32.totalorder %s14, 0
      %p97 = por %p95, %p96
      %p98 = scmp.ne.s32.totalorder %s90, %s92
      %p99 = scmp.eq.s32.totalorder %s19, 1
      %p100 = por %p98, %p99
      %p101 = scmp.ne.s32.totalorder %s92, %s93
      %p102 = scmp.eq.s32.totalorder %s19, 0
      %p103 = por %p101, %p102
      %p104 = scmp.ne.s32.totalorder %s92, %s93
      %p105 = scmp.eq.s32.totalorder %s20, 1
      %p106 = por %p104, %p105
      %p108 = scmp.ne.s32.totalorder %s93, %s107
      %p109 = scmp.eq.s32.totalorder %s20, 0
      %p110 = por %p108, %p109
      %s111 = ssub.s32 %s14, %s21
      %p112 = scmp.eq.s32.totalorder %s111, 0
      %s114 = sadd.s32 %s113, 1
      %s115 = scalar_select %p112, %s113, %s114
      %p118 = pneg %p112
      %p119 = scmp.eq.s32.totalorder %s14, 1
      %p120 = por %p118, %p119
      %p121 = scmp.ne.s32.totalorder %s113, %s116
      %p122 = scmp.eq.s32.totalorder %s14, 0
      %p123 = por %p121, %p122
      %p124 = scmp.ne.s32.totalorder %s113, %s116
      %p125 = scmp.eq.s32.totalorder %s19, 1
      %p126 = por %p124, %p125
      %p127 = scmp.ne.s32.totalorder %s116, %s117
      %p128 = scmp.eq.s32.totalorder %s19, 0
      %p129 = por %p127, %p128
      %p130 = scmp.ne.s32.totalorder %s116, %s117
      %p131 = scmp.eq.s32.totalorder %s20, 1
      %p132 = por %p130, %p131
      %p134 = scmp.ne.s32.totalorder %s117, %s133
      %p135 = scmp.eq.s32.totalorder %s20, 0
      %p136 = por %p134, %p135
      %p137 = scmp.le.s32.totalorder 1, %s14
      %p138 = scmp.lt.s32.totalorder %s14, 3
      %p139 = pnand %p137, %p138
      %p140 = pneg %p139
      // Predicated region
      $region9: #{tpu_custom_call.1} parent=5 // pred_check
        _
      $region10: #{tpu_custom_call.1} parent=5 // pred_check_branch
        %142 = sbr.rel (%p139) target = $region12
      $region11: #{tpu_custom_call.1} parent=5 // pred_region
        %s143 = ssub.s32 %s14, 1
        // Predicated region
        $region13: #{tpu_custom_call.1} parent=11 // pred_check
          %p144 = pneg %p61
        $region14: #{tpu_custom_call.1} parent=11 // pred_check_branch
          %146 = sbr.rel (%p144) target = $region16
        $region15: #{tpu_custom_call.1} parent=11 // pred_region
          _
        $region16: #{tpu_custom_call.1} parent=11 // pred_fallthru
          _
        // Predicated region
        $region17: #{tpu_custom_call.1} parent=11 // pred_check
          %p147 = pneg %p82
        $region18: #{tpu_custom_call.1} parent=11 // pred_check_branch
          %149 = sbr.rel (%p147) target = $region20
        $region19: #{tpu_custom_call.1} parent=11 // pred_region
          %s151 = ssub.s32 8192, 8192
          %152 = vsyncadd [#allocation6], %s151
          %s153 = sshll.u32 [#allocation5], 4
          %s154 = int_to_ptr.vmem [resolvable:$true] %s153
          %159 = dma.hbm_to_vmem [thread:$0]  %s2, 8192, %s154, [#allocation6], 512, 512, 32
        $region20: #{tpu_custom_call.1} parent=11 // pred_fallthru
          _
        // Predicated region
        $region21: #{tpu_custom_call.1} parent=11 // pred_check
          %p160 = pneg %p103
        $region22: #{tpu_custom_call.1} parent=11 // pred_check_branch
          %162 = sbr.rel (%p160) target = $region24
        $region23: #{tpu_custom_call.1} parent=11 // pred_region
          _
        $region24: #{tpu_custom_call.1} parent=11 // pred_fallthru
          _
      $region12: #{tpu_custom_call.1} parent=5 // pred_fallthru
        _
      %p163 = scmp.lt.s32.totalorder %s14, 2
      // Predicated region
      $region25: #{tpu_custom_call.1} parent=5 // pred_check
        %p164 = pneg %p163
      $region26: #{tpu_custom_call.1} parent=5 // pred_check_branch
        %166 = sbr.rel (%p164) target = $region28
      $region27: #{tpu_custom_call.1} parent=5 // pred_region
        // Predicated region
        $region29: #{tpu_custom_call.1} parent=27 // pred_check
          %p167 = pneg %p34
        $region30: #{tpu_custom_call.1} parent=27 // pred_check_branch
          %169 = sbr.rel (%p167) target = $region32
        $region31: #{tpu_custom_call.1} parent=27 // pred_region
          %s170 = smul.u32 8, %s14
          %p171 = scmp.lt.s32.totalorder %s170, 15
          %s172 = scalar_select %p171, %s170, 15
          %s173 = smul.addr %s172, 8
          %s174 = scalar_lea.vmem %s0, %s173
          %s175 = smul.u32 8, %s14
        $region32: #{tpu_custom_call.1} parent=27 // pred_fallthru
          _
      $region28: #{tpu_custom_call.1} parent=5 // pred_fallthru
        _
      %p176 = scmp.le.s32.totalorder 1, %s14
      %p177 = scmp.lt.s32.totalorder %s14, 3
      %p178 = pnand %p176, %p177
      %p179 = pneg %p178
      // Predicated region
      $region33: #{tpu_custom_call.1} parent=5 // pred_check
        _
      $region34: #{tpu_custom_call.1} parent=5 // pred_check_branch
        %181 = sbr.rel (%p178) target = $region36
      $region35: #{tpu_custom_call.1} parent=5 // pred_region
        %s182 = ssub.s32 %s14, 1
        // Predicated region
        $region37: #{tpu_custom_call.1} parent=35 // pred_check
          %p183 = pneg %p82
        $region38: #{tpu_custom_call.1} parent=35 // pred_check_branch
          %185 = sbr.rel (%p183) target = $region40
        $region39: #{tpu_custom_call.1} parent=35 // pred_region
          %186 = dma.done [#allocation6], 8192
        $region40: #{tpu_custom_call.1} parent=35 // pred_fallthru
          _
        %s187 = smul.u32 8, %s19
        %p188 = scmp.lt.s32.totalorder %s187, 15
        %s189 = scalar_select %p188, %s187, 15
        %s190 = smul.addr %s189, 8
        %s191 = scalar_lea.vmem %s0, %s190
        %p192 = pneg %p40
        %p193 = pneg %p37
        %p194 = pneg %p61
        %p195 = pneg %p58
        %p196 = pneg %p82
        %p197 = pneg %p79
        %p198 = pneg %p103
        %p199 = pneg %p100
        %p200 = pneg %p129
        %p201 = pneg %p126
        %s202 = sand.u32 %s116, 1
        %s203 = scalar_lea.sflag [#allocation7], %s202
        %s204 = sand.u32 %s116, 1
        %s205 = smul.addr %s204, 64
        %s206 = scalar_lea.vmem [#allocation8], %s205
        %s207 = smul.u32 8, %s19
        %p208 = scmp.lt.s32.totalorder %s207, 15
        %s209 = scalar_select %p208, %s207, 15
        %s210 = smul.addr %s209, 8
        %s211 = scalar_lea.vmem %s0, %s210
        %s212 = smul.u32 8, %s19
        %s213 = smul.u32 8, %s19
        %p214 = scmp.eq.s32.totalorder %s19, 0
        // Predicated region
        $region41: #{tpu_custom_call.1} parent=35 // pred_check
          %p215 = pneg %p214
        $region42: #{tpu_custom_call.1} parent=35 // pred_check_branch
          %217 = sbr.rel (%p215) target = $region44
        $region43: #{tpu_custom_call.1} parent=35 // pred_region
          %218 = vst [vmem:[#allocation3] sm:$0xff] 0.0
          %219 = vst [vmem:[#allocation4] sm:$0xff] 0.0
        $region44: #{tpu_custom_call.1} parent=35 // pred_fallthru
          _
        %v220 = vld [vmem:[%s211] sm:$0xff]
        %v221 = vld [vmem:[%s211 + $0x8] sm:$0xff]
        %v222 = vld [vmem:[%s211 + $0x10] sm:$0xff]
        %v223 = vld [vmem:[%s211 + $0x18] sm:$0xff]
        %v224 = vld [vmem:[%s211 + $0x20] sm:$0xff]
        %v225 = vld [vmem:[%s211 + $0x28] sm:$0xff]
        %v226 = vld [vmem:[%s211 + $0x30] sm:$0xff]
        %v227 = vld [vmem:[%s211 + $0x38] sm:$0xff]
        %v228 = vld [vmem:[%s1] sm:$0xff]
        %v229 = vld [vmem:[%s1 + $0x8] sm:$0xff]
        %v230 = vld [vmem:[%s1 + $0x10] sm:$0xff]
        %v231 = vld [vmem:[%s1 + $0x18] sm:$0xff]
        %v232 = vld [vmem:[%s1 + $0x20] sm:$0xff]
        %v233 = vld [vmem:[%s1 + $0x28] sm:$0xff]
        %v234 = vld [vmem:[%s1 + $0x30] sm:$0xff]
        %v235 = vld [vmem:[%s1 + $0x38] sm:$0xff]
        %v236 = vld [vmem:[%s1 + $0x40] sm:$0xff]
        %v237 = vld [vmem:[%s1 + $0x48] sm:$0xff]
        %v238 = vld [vmem:[%s1 + $0x50] sm:$0xff]
        %v239 = vld [vmem:[%s1 + $0x58] sm:$0xff]
        %v240 = vld [vmem:[%s1 + $0x60] sm:$0xff]
        %v241 = vld [vmem:[%s1 + $0x68] sm:$0xff]
        %v242 = vld [vmem:[%s1 + $0x70] sm:$0xff]
        %v243 = vld [vmem:[%s1 + $0x78] sm:$0xff]
        %v244 = vld [vmem:[%s3] sm:$0xf]
        %v246 = vlaneseq
        %v247 = vshrl.u32 %v246, 7
        %v248 = vsub.s32 0, %v247
        %v249 = vrot.slane %v244, %v248
        %v250 = vlaneseq
        %v251 = vshrl.u32 %v250, 7
        %v252 = vsub.s32 1, %v251
        %v253 = vrot.slane %v244, %v252
        %v254 = vlaneseq
        %v255 = vshrl.u32 %v254, 7
        %v256 = vsub.s32 2, %v255
        %v257 = vrot.slane %v244, %v256
        %v258 = vlaneseq
        %v259 = vshrl.u32 %v258, 7
        %v260 = vsub.s32 3, %v259
        %v261 = vrot.slane %v244, %v260
        %vm266 = vcmask 261120
        %v268 = vsel %vm266, %v220, 0
        %v271 = vsel %vm266, %v221, 0
        %v274 = vsel %vm266, %v222, 0
        %v277 = vsel %vm266, %v223, 0
        %v280 = vsel %vm266, %v224, 0
        %v283 = vsel %vm266, %v225, 0
        %v286 = vsel %vm266, %v226, 0
        %v289 = vsel %vm266, %v227, 0
        %291 = vmatprep.subr.mxu0 %v229
        %292 = vmatpush1.msra.mxu0 %v228
        %293 = vmatprep.subr.mxu0 %v233
        %294 = vmatpush1.msra.mxu0 %v232
        %295 = vmatprep.subr.mxu0 %v237
        %296 = vmatpush1.msra.mxu0 %v236
        %297 = vmatprep.subr.mxu0 %v241
        %298 = vmatpush1.msra.mxu0 %v240
        %299 = vmatprep.subr.mxu0 0.0
        %300 = vmatpush1.msra.mxu0 0.0
        %301 = vmatprep.subr.mxu0 0.0
        %302 = vmatpush1.msra.mxu0 0.0
        %303 = vmatprep.subr.mxu0 0.0
        %304 = vmatpush1.msra.mxu0 0.0
        %305 = vmatprep.subr.mxu0 0.0
        %306 = vmatpush1.msra.mxu0 0.0
        %307 = vmatprep.subr.mxu0 0.0
        %308 = vmatpush1.msra.mxu0 0.0
        %309 = vmatprep.subr.mxu0 0.0
        %310 = vmatpush1.msra.mxu0 0.0
        %311 = vmatprep.subr.mxu0 0.0
        %312 = vmatpush1.msra.mxu0 0.0
        %313 = vmatprep.subr.mxu0 0.0
        %314 = vmatpush1.msra.mxu0 0.0
        %315 = vmatprep.subr.mxu0 0.0
        %316 = vmatpush1.msra.mxu0 0.0
        %317 = vmatprep.subr.mxu0 0.0
        %318 = vmatpush1.msra.mxu0 0.0
        %319 = vmatprep.subr.mxu0 0.0
        %320 = vmatpush1.msra.mxu0 0.0
        %321 = vmatprep.subr.mxu0 0.0
        %322 = vmatpush1.msra.mxu0 0.0
        %323 = vmatprep.subr.mxu0 0.0
        %324 = vmatpush1.msra.mxu0 0.0
        %325 = vmatprep.subr.mxu0 0.0
        %326 = vmatpush1.msra.mxu0 0.0
        %327 = vmatprep.subr.mxu0 0.0
        %328 = vmatpush1.msra.mxu0 0.0
        %329 = vmatprep.subr.mxu0 0.0
        %330 = vmatpush1.msra.mxu0 0.0
        %331 = vmatprep.subr.mxu0 0.0
        %332 = vmatpush1.msra.mxu0 0.0
        %333 = vmatprep.subr.mxu0 0.0
        %334 = vmatpush1.msra.mxu0 0.0
        %335 = vmatprep.subr.mxu0 0.0
        %336 = vmatpush1.msra.mxu0 0.0
        %337 = vmatprep.subr.mxu0 0.0
        %338 = vmatpush1.msra.mxu0 0.0
        %339 = vmatprep.subr.mxu0 0.0
        %340 = vmatpush1.msra.mxu0 0.0
        %341 = vmatprep.subr.mxu0 0.0
        %342 = vmatpush1.msra.mxu0 0.0
        %343 = vmatprep.subr.mxu0 0.0
        %344 = vmatpush1.msra.mxu0 0.0
        %345 = vmatprep.subr.mxu0 0.0
        %346 = vmatpush1.msra.mxu0 0.0
        %347 = vmatprep.subr.mxu0 0.0
        %348 = vmatpush1.msra.mxu0 0.0
        %349 = vmatprep.subr.mxu0 0.0
        %350 = vmatpush1.msra.mxu0 0.0
        %351 = vmatprep.subr.mxu0 0.0
        %352 = vmatpush1.msra.mxu0 0.0
        %353 = vmatprep.subr.mxu0 0.0
        %354 = vmatpush1.msra.mxu0 0.0
        %355 = vmatprep.mubr.f32.mxu0 0.0
        %356 = vmatmul.mubr.f32.gmra.mrb[0].mxu0 %v268
        %v357 = vpop.f32.mrb[0].mxu0
        %v358 = vadd.f32 %v249, %v357
        %v359 = vpop.f32.mrb[0].mxu0
        %v360 = vadd.f32 %v253, %v359
        %361 = vmatprep.mubr.f32.mxu0 0.0
        %362 = vmatmul.mubr.f32.gmra.mrb[0].mxu0 %v271
        %v363 = vpop.f32.mrb[0].mxu0
        %v364 = vadd.f32 %v249, %v363
        %v365 = vpop.f32.mrb[0].mxu0
        %v366 = vadd.f32 %v253, %v365
        %367 = vmatprep.mubr.f32.mxu0 0.0
        %368 = vmatmul.mubr.f32.gmra.mrb[0].mxu0 %v274
        %v369 = vpop.f32.mrb[0].mxu0
        %v370 = vadd.f32 %v249, %v369
        %v371 = vpop.f32.mrb[0].mxu0
        %v372 = vadd.f32 %v253, %v371
        %373 = vmatprep.mubr.f32.mxu0 0.0
        %374 = vmatmul.mubr.f32.gmra.mrb[0].mxu0 %v277
        %v375 = vpop.f32.mrb[0].mxu0
        %v376 = vadd.f32 %v249, %v375
        %v377 = vpop.f32.mrb[0].mxu0
        %v378 = vadd.f32 %v253, %v377
        %379 = vmatprep.mubr.f32.mxu0 0.0
        %380 = vmatmul.mubr.f32.gmra.mrb[0].mxu0 %v280
        %v381 = vpop.f32.mrb[0].mxu0
        %v382 = vadd.f32 %v249, %v381
        %v383 = vpop.f32.mrb[0].mxu0
        %v384 = vadd.f32 %v253, %v383
        %385 = vmatprep.mubr.f32.mxu0 0.0
        %386 = vmatmul.mubr.f32.gmra.mrb[0].mxu0 %v283
        %v387 = vpop.f32.mrb[0].mxu0
        %v388 = vadd.f32 %v249, %v387
        %v389 = vpop.f32.mrb[0].mxu0
        %v390 = vadd.f32 %v253, %v389
        %391 = vmatprep.mubr.f32.mxu0 0.0
        %392 = vmatmul.mubr.f32.gmra.mrb[0].mxu0 %v286
        %v393 = vpop.f32.mrb[0].mxu0
        %v394 = vadd.f32 %v249, %v393
        %v395 = vpop.f32.mrb[0].mxu0
        %v396 = vadd.f32 %v253, %v395
        %397 = vmatprep.mubr.f32.mxu0 0.0
        %398 = vmatmul.mubr.f32.gmra.mrb[0].mxu0 %v289
        %v399 = vpop.f32.mrb[0].mxu0
        %v400 = vadd.f32 %v249, %v399
        %v401 = vpop.f32.mrb[0].mxu0
        %v402 = vadd.f32 %v253, %v401
        %403 = vdwg.mxu0
        %404 = vmatprep.subr.mxu0 %v231
        %405 = vmatpush1.msra.mxu0 %v230
        %406 = vmatprep.subr.mxu0 %v235
        %407 = vmatpush1.msra.mxu0 %v234
        %408 = vmatprep.subr.mxu0 %v239
        %409 = vmatpush1.msra.mxu0 %v238
        %410 = vmatprep.subr.mxu0 %v243
        %411 = vmatpush1.msra.mxu0 %v242
        %412 = vmatprep.subr.mxu0 0.0
        %413 = vmatpush1.msra.mxu0 0.0
        %414 = vmatprep.subr.mxu0 0.0
        %415 = vmatpush1.msra.mxu0 0.0
        %416 = vmatprep.subr.mxu0 0.0
        %417 = vmatpush1.msra.mxu0 0.0
        %418 = vmatprep.subr.mxu0 0.0
        %419 = vmatpush1.msra.mxu0 0.0
        %420 = vmatprep.subr.mxu0 0.0
        %421 = vmatpush1.msra.mxu0 0.0
        %422 = vmatprep.subr.mxu0 0.0
        %423 = vmatpush1.msra.mxu0 0.0
        %424 = vmatprep.subr.mxu0 0.0
        %425 = vmatpush1.msra.mxu0 0.0
        %426 = vmatprep.subr.mxu0 0.0
        %427 = vmatpush1.msra.mxu0 0.0
        %428 = vmatprep.subr.mxu0 0.0
        %429 = vmatpush1.msra.mxu0 0.0
        %430 = vmatprep.subr.mxu0 0.0
        %431 = vmatpush1.msra.mxu0 0.0
        %432 = vmatprep.subr.mxu0 0.0
        %433 = vmatpush1.msra.mxu0 0.0
        %434 = vmatprep.subr.mxu0 0.0
        %435 = vmatpush1.msra.mxu0 0.0
        %436 = vmatprep.subr.mxu0 0.0
        %437 = vmatpush1.msra.mxu0 0.0
        %438 = vmatprep.subr.mxu0 0.0
        %439 = vmatpush1.msra.mxu0 0.0
        %440 = vmatprep.subr.mxu0 0.0
        %441 = vmatpush1.msra.mxu0 0.0
        %442 = vmatprep.subr.mxu0 0.0
        %443 = vmatpush1.msra.mxu0 0.0
        %444 = vmatprep.subr.mxu0 0.0
        %445 = vmatpush1.msra.mxu0 0.0
        %446 = vmatprep.subr.mxu0 0.0
        %447 = vmatpush1.msra.mxu0 0.0
        %448 = vmatprep.subr.mxu0 0.0
        %449 = vmatpush1.msra.mxu0 0.0
        %450 = vmatprep.subr.mxu0 0.0
        %451 = vmatpush1.msra.mxu0 0.0
        %452 = vmatprep.subr.mxu0 0.0
        %453 = vmatpush1.msra.mxu0 0.0
        %454 = vmatprep.subr.mxu0 0.0
        %455 = vmatpush1.msra.mxu0 0.0
        %456 = vmatprep.subr.mxu0 0.0
        %457 = vmatpush1.msra.mxu0 0.0
        %458 = vmatprep.subr.mxu0 0.0
        %459 = vmatpush1.msra.mxu0 0.0
        %460 = vmatprep.subr.mxu0 0.0
        %461 = vmatpush1.msra.mxu0 0.0
        %462 = vmatprep.subr.mxu0 0.0
        %463 = vmatpush1.msra.mxu0 0.0
        %464 = vmatprep.subr.mxu0 0.0
        %465 = vmatpush1.msra.mxu0 0.0
        %466 = vmatprep.subr.mxu0 0.0
        %467 = vmatpush1.msra.mxu0 0.0
        %468 = vmatprep.mubr.f32.mxu0 0.0
        %469 = vmatmul.mubr.f32.gmra.mrb[0].mxu0 %v268
        %v470 = vpop.f32.mrb[0].mxu0
        %v471 = vadd.f32 %v257, %v470
        %v472 = vpop.f32.mrb[0].mxu0
        %v473 = vadd.f32 %v261, %v472
        %474 = vmatprep.mubr.f32.mxu0 0.0
        %475 = vmatmul.mubr.f32.gmra.mrb[0].mxu0 %v271
        %v476 = vpop.f32.mrb[0].mxu0
        %v477 = vadd.f32 %v257, %v476
        %v478 = vpop.f32.mrb[0].mxu0
        %v479 = vadd.f32 %v261, %v478
        %480 = vmatprep.mubr.f32.mxu0 0.0
        %481 = vmatmul.mubr.f32.gmra.mrb[0].mxu0 %v274
        %v482 = vpop.f32.mrb[0].mxu0
        %v483 = vadd.f32 %v257, %v482
        %v484 = vpop.f32.mrb[0].mxu0
        %v485 = vadd.f32 %v261, %v484
        %486 = vmatprep.mubr.f32.mxu0 0.0
        %487 = vmatmul.mubr.f32.gmra.mrb[0].mxu0 %v277
        %v488 = vpop.f32.mrb[0].mxu0
        %v489 = vadd.f32 %v257, %v488
        %v490 = vpop.f32.mrb[0].mxu0
        %v491 = vadd.f32 %v261, %v490
        %492 = vmatprep.mubr.f32.mxu0 0.0
        %493 = vmatmul.mubr.f32.gmra.mrb[0].mxu0 %v280
        %v494 = vpop.f32.mrb[0].mxu0
        %v495 = vadd.f32 %v257, %v494
        %v496 = vpop.f32.mrb[0].mxu0
        %v497 = vadd.f32 %v261, %v496
        %498 = vmatprep.mubr.f32.mxu0 0.0
        %499 = vmatmul.mubr.f32.gmra.mrb[0].mxu0 %v283
        %v500 = vpop.f32.mrb[0].mxu0
        %v501 = vadd.f32 %v257, %v500
        %v502 = vpop.f32.mrb[0].mxu0
        %v503 = vadd.f32 %v261, %v502
        %504 = vmatprep.mubr.f32.mxu0 0.0
        %505 = vmatmul.mubr.f32.gmra.mrb[0].mxu0 %v286
        %v506 = vpop.f32.mrb[0].mxu0
        %v507 = vadd.f32 %v257, %v506
        %v508 = vpop.f32.mrb[0].mxu0
        %v509 = vadd.f32 %v261, %v508
        %510 = vmatprep.mubr.f32.mxu0 0.0
        %511 = vmatmul.mubr.f32.gmra.mrb[0].mxu0 %v289
        %v512 = vpop.f32.mrb[0].mxu0
        %v513 = vadd.f32 %v257, %v512
        %v514 = vpop.f32.mrb[0].mxu0
        %v515 = vadd.f32 %v261, %v514
        %516 = vdwg.mxu0
        %517 = vst [vmem:[#allocation2] sm:$0xff] %v358
        %518 = vst [vmem:[#allocation2 + $0x8] sm:$0xff] %v360
        %519 = vst [vmem:[#allocation2 + $0x10] sm:$0xff] %v471
        %520 = vst [vmem:[#allocation2 + $0x18] sm:$0xff] %v473
        %521 = vst [vmem:[#allocation2 + $0x20] sm:$0xff] %v364
        %522 = vst [vmem:[#allocation2 + $0x28] sm:$0xff] %v366
        %523 = vst [vmem:[#allocation2 + $0x30] sm:$0xff] %v477
        %524 = vst [vmem:[#allocation2 + $0x38] sm:$0xff] %v479
        %525 = vst [vmem:[#allocation2 + $0x40] sm:$0xff] %v370
        %526 = vst [vmem:[#allocation2 + $0x48] sm:$0xff] %v372
        %527 = vst [vmem:[#allocation2 + $0x50] sm:$0xff] %v483
        %528 = vst [vmem:[#allocation2 + $0x58] sm:$0xff] %v485
        %529 = vst [vmem:[#allocation2 + $0x60] sm:$0xff] %v376
        %530 = vst [vmem:[#allocation2 + $0x68] sm:$0xff] %v378
        %531 = vst [vmem:[#allocation2 + $0x70] sm:$0xff] %v489
        %532 = vst [vmem:[#allocation2 + $0x78] sm:$0xff] %v491
        %533 = vst [vmem:[#allocation2 + $0x80] sm:$0xff] %v382
        %534 = vst [vmem:[#allocation2 + $0x88] sm:$0xff] %v384
        %535 = vst [vmem:[#allocation2 + $0x90] sm:$0xff] %v495
        %536 = vst [vmem:[#allocation2 + $0x98] sm:$0xff] %v497
        %537 = vst [vmem:[#allocation2 + $0xa0] sm:$0xff] %v388
        %538 = vst [vmem:[#allocation2 + $0xa8] sm:$0xff] %v390
        %539 = vst [vmem:[#allocation2 + $0xb0] sm:$0xff] %v501
        %540 = vst [vmem:[#allocation2 + $0xb8] sm:$0xff] %v503
        %541 = vst [vmem:[#allocation2 + $0xc0] sm:$0xff] %v394
        %542 = vst [vmem:[#allocation2 + $0xc8] sm:$0xff] %v396
        %543 = vst [vmem:[#allocation2 + $0xd0] sm:$0xff] %v507
        %544 = vst [vmem:[#allocation2 + $0xd8] sm:$0xff] %v509
        %545 = vst [vmem:[#allocation2 + $0xe0] sm:$0xff] %v400
        %546 = vst [vmem:[#allocation2 + $0xe8] sm:$0xff] %v402
        %547 = vst [vmem:[#allocation2 + $0xf0] sm:$0xff] %v513
        %548 = vst [vmem:[#allocation2 + $0xf8] sm:$0xff] %v515
        %v549 = vld [vmem:[#allocation5] sm:$0xff]
        %v550 = vld [vmem:[#allocation5 + $0x8] sm:$0xff]
        %v551 = vld [vmem:[#allocation5 + $0x10] sm:$0xff]
        %v552 = vld [vmem:[#allocation5 + $0x18] sm:$0xff]
        %v553 = vld [vmem:[#allocation5 + $0x20] sm:$0xff]
        %v554 = vld [vmem:[#allocation5 + $0x28] sm:$0xff]
        %v555 = vld [vmem:[#allocation5 + $0x30] sm:$0xff]
        %v556 = vld [vmem:[#allocation5 + $0x38] sm:$0xff]
        %v557 = vld [vmem:[#allocation5 + $0x40] sm:$0xff]
        %v558 = vld [vmem:[#allocation5 + $0x48] sm:$0xff]
        %v559 = vld [vmem:[#allocation5 + $0x50] sm:$0xff]
        %v560 = vld [vmem:[#allocation5 + $0x58] sm:$0xff]
        %v561 = vld [vmem:[#allocation5 + $0x60] sm:$0xff]
        %v562 = vld [vmem:[#allocation5 + $0x68] sm:$0xff]
        %v563 = vld [vmem:[#allocation5 + $0x70] sm:$0xff]
        %v564 = vld [vmem:[#allocation5 + $0x78] sm:$0xff]
        %v565 = vld [vmem:[#allocation5 + $0x80] sm:$0xff]
        %v566 = vld [vmem:[#allocation5 + $0x88] sm:$0xff]
        %v567 = vld [vmem:[#allocation5 + $0x90] sm:$0xff]
        %v568 = vld [vmem:[#allocation5 + $0x98] sm:$0xff]
        %v569 = vld [vmem:[#allocation5 + $0xa0] sm:$0xff]
        %v570 = vld [vmem:[#allocation5 + $0xa8] sm:$0xff]
        %v571 = vld [vmem:[#allocation5 + $0xb0] sm:$0xff]
        %v572 = vld [vmem:[#allocation5 + $0xb8] sm:$0xff]
        %v573 = vld [vmem:[#allocation5 + $0xc0] sm:$0xff]
        %v574 = vld [vmem:[#allocation5 + $0xc8] sm:$0xff]
        %v575 = vld [vmem:[#allocation5 + $0xd0] sm:$0xff]
        %v576 = vld [vmem:[#allocation5 + $0xd8] sm:$0xff]
        %v577 = vld [vmem:[#allocation5 + $0xe0] sm:$0xff]
        %v578 = vld [vmem:[#allocation5 + $0xe8] sm:$0xff]
        %v579 = vld [vmem:[#allocation5 + $0xf0] sm:$0xff]
        %v580 = vld [vmem:[#allocation5 + $0xf8] sm:$0xff]
        %v581 = vld [vmem:[#allocation5 + $0x100] sm:$0xff]
        %v582 = vld [vmem:[#allocation5 + $0x108] sm:$0xff]
        %v583 = vld [vmem:[#allocation5 + $0x110] sm:$0xff]
        %v584 = vld [vmem:[#allocation5 + $0x118] sm:$0xff]
        %v585 = vld [vmem:[#allocation5 + $0x120] sm:$0xff]
        %v586 = vld [vmem:[#allocation5 + $0x128] sm:$0xff]
        %v587 = vld [vmem:[#allocation5 + $0x130] sm:$0xff]
        %v588 = vld [vmem:[#allocation5 + $0x138] sm:$0xff]
        %v589 = vld [vmem:[#allocation5 + $0x140] sm:$0xff]
        %v590 = vld [vmem:[#allocation5 + $0x148] sm:$0xff]
        %v591 = vld [vmem:[#allocation5 + $0x150] sm:$0xff]
        %v592 = vld [vmem:[#allocation5 + $0x158] sm:$0xff]
        %v593 = vld [vmem:[#allocation5 + $0x160] sm:$0xff]
        %v594 = vld [vmem:[#allocation5 + $0x168] sm:$0xff]
        %v595 = vld [vmem:[#allocation5 + $0x170] sm:$0xff]
        %v596 = vld [vmem:[#allocation5 + $0x178] sm:$0xff]
        %v597 = vld [vmem:[#allocation5 + $0x180] sm:$0xff]
        %v598 = vld [vmem:[#allocation5 + $0x188] sm:$0xff]
        %v599 = vld [vmem:[#allocation5 + $0x190] sm:$0xff]
        %v600 = vld [vmem:[#allocation5 + $0x198] sm:$0xff]
        %v601 = vld [vmem:[#allocation5 + $0x1a0] sm:$0xff]
        %v602 = vld [vmem:[#allocation5 + $0x1a8] sm:$0xff]
        %v603 = vld [vmem:[#allocation5 + $0x1b0] sm:$0xff]
        %v604 = vld [vmem:[#allocation5 + $0x1b8] sm:$0xff]
        %v605 = vld [vmem:[#allocation5 + $0x1c0] sm:$0xff]
        %v606 = vld [vmem:[#allocation5 + $0x1c8] sm:$0xff]
        %v607 = vld [vmem:[#allocation5 + $0x1d0] sm:$0xff]
        %v608 = vld [vmem:[#allocation5 + $0x1d8] sm:$0xff]
        %v609 = vld [vmem:[#allocation5 + $0x1e0] sm:$0xff]
        %v610 = vld [vmem:[#allocation5 + $0x1e8] sm:$0xff]
        %v611 = vld [vmem:[#allocation5 + $0x1f0] sm:$0xff]
        %v612 = vld [vmem:[#allocation5 + $0x1f8] sm:$0xff]
        %v613 = vld [vmem:[#allocation3] sm:$0xff]
        %v614 = vld [vmem:[#allocation4] sm:$0xff]
        %s615 = smul.u32 0, 4
        %s616 = smul.addr %s615, 8
        %s617 = scalar_lea.vmem [#allocation2], %s616
        %v618 = vld [vmem:[%s617] sm:$0xff]
        %v619 = vld [vmem:[%s617 + $0x8] sm:$0xff]
        %v620 = vld [vmem:[%s617 + $0x10] sm:$0xff]
        %v621 = vld [vmem:[%s617 + $0x18] sm:$0xff]
        %622 = vmatprep.subr.mxu0 %v550
        %623 = vmatpush1.msra.mxu0 %v549
        %624 = vmatprep.subr.mxu0 %v554
        %625 = vmatpush1.msra.mxu0 %v553
        %626 = vmatprep.subr.mxu0 %v558
        %627 = vmatpush1.msra.mxu0 %v557
        %628 = vmatprep.subr.mxu0 %v562
        %629 = vmatpush1.msra.mxu0 %v561
        %630 = vmatprep.subr.mxu0 %v566
        %631 = vmatpush1.msra.mxu0 %v565
        %632 = vmatprep.subr.mxu0 %v570
        %633 = vmatpush1.msra.mxu0 %v569
        %634 = vmatprep.subr.mxu0 %v574
        %635 = vmatpush1.msra.mxu0 %v573
        %636 = vmatprep.subr.mxu0 %v578
        %637 = vmatpush1.msra.mxu0 %v577
        %638 = vmatprep.subr.mxu0 %v582
        %639 = vmatpush1.msra.mxu0 %v581
        %640 = vmatprep.subr.mxu0 %v586
        %641 = vmatpush1.msra.mxu0 %v585
        %642 = vmatprep.subr.mxu0 %v590
        %643 = vmatpush1.msra.mxu0 %v589
        %644 = vmatprep.subr.mxu0 %v594
        %645 = vmatpush1.msra.mxu0 %v593
        %646 = vmatprep.subr.mxu0 %v598
        %647 = vmatpush1.msra.mxu0 %v597
        %648 = vmatprep.subr.mxu0 %v602
        %649 = vmatpush1.msra.mxu0 %v601
        %650 = vmatprep.subr.mxu0 %v606
        %651 = vmatpush1.msra.mxu0 %v605
        %652 = vmatprep.subr.mxu0 %v610
        %653 = vmatpush1.msra.mxu0 %v609
        %654 = vmatprep.subr.mxu0 0.0
        %655 = vmatpush1.msra.mxu0 0.0
        %656 = vmatprep.subr.mxu0 0.0
        %657 = vmatpush1.msra.mxu0 0.0
        %658 = vmatprep.subr.mxu0 0.0
        %659 = vmatpush1.msra.mxu0 0.0
        %660 = vmatprep.subr.mxu0 0.0
        %661 = vmatpush1.msra.mxu0 0.0
        %662 = vmatprep.subr.mxu0 0.0
        %663 = vmatpush1.msra.mxu0 0.0
        %664 = vmatprep.subr.mxu0 0.0
        %665 = vmatpush1.msra.mxu0 0.0
        %666 = vmatprep.subr.mxu0 0.0
        %667 = vmatpush1.msra.mxu0 0.0
        %668 = vmatprep.subr.mxu0 0.0
        %669 = vmatpush1.msra.mxu0 0.0
        %670 = vmatprep.subr.mxu0 0.0
        %671 = vmatpush1.msra.mxu0 0.0
        %672 = vmatprep.subr.mxu0 0.0
        %673 = vmatpush1.msra.mxu0 0.0
        %674 = vmatprep.subr.mxu0 0.0
        %675 = vmatpush1.msra.mxu0 0.0
        %676 = vmatprep.subr.mxu0 0.0
        %677 = vmatpush1.msra.mxu0 0.0
        %678 = vmatprep.subr.mxu0 0.0
        %679 = vmatpush1.msra.mxu0 0.0
        %680 = vmatprep.subr.mxu0 0.0
        %681 = vmatpush1.msra.mxu0 0.0
        %682 = vmatprep.subr.mxu0 0.0
        %683 = vmatpush1.msra.mxu0 0.0
        %684 = vmatprep.subr.mxu0 0.0
        %685 = vmatpush1.msra.mxu0 0.0
        %686 = vmatprep.mubr.f32.mxu0 0.0
        %687 = vmatmul.mubr.f32.gmra.mrb[0].mxu0 %v613
        %v688 = vpop.f32.mrb[0].mxu0
        %v689 = vadd.f32 0.0, %v688
        %v690 = vpop.f32.mrb[0].mxu0
        %v691 = vadd.f32 0.0, %v690
        %692 = vdwg.mxu0
        %693 = vmatprep.subr.mxu0 %v552
        %694 = vmatpush1.msra.mxu0 %v551
        %695 = vmatprep.subr.mxu0 %v556
        %696 = vmatpush1.msra.mxu0 %v555
        %697 = vmatprep.subr.mxu0 %v560
        %698 = vmatpush1.msra.mxu0 %v559
        %699 = vmatprep.subr.mxu0 %v564
        %700 = vmatpush1.msra.mxu0 %v563
        %701 = vmatprep.subr.mxu0 %v568
        %702 = vmatpush1.msra.mxu0 %v567
        %703 = vmatprep.subr.mxu0 %v572
        %704 = vmatpush1.msra.mxu0 %v571
        %705 = vmatprep.subr.mxu0 %v576
        %706 = vmatpush1.msra.mxu0 %v575
        %707 = vmatprep.subr.mxu0 %v580
        %708 = vmatpush1.msra.mxu0 %v579
        %709 = vmatprep.subr.mxu0 %v584
        %710 = vmatpush1.msra.mxu0 %v583
        %711 = vmatprep.subr.mxu0 %v588
        %712 = vmatpush1.msra.mxu0 %v587
        %713 = vmatprep.subr.mxu0 %v592
        %714 = vmatpush1.msra.mxu0 %v591
        %715 = vmatprep.subr.mxu0 %v596
        %716 = vmatpush1.msra.mxu0 %v595
        %717 = vmatprep.subr.mxu0 %v600
        %718 = vmatpush1.msra.mxu0 %v599
        %719 = vmatprep.subr.mxu0 %v604
        %720 = vmatpush1.msra.mxu0 %v603
        %721 = vmatprep.subr.mxu0 %v608
        %722 = vmatpush1.msra.mxu0 %v607
        %723 = vmatprep.subr.mxu0 %v612
        %724 = vmatpush1.msra.mxu0 %v611
        %725 = vmatprep.subr.mxu0 0.0
        %726 = vmatpush1.msra.mxu0 0.0
        %727 = vmatprep.subr.mxu0 0.0
        %728 = vmatpush1.msra.mxu0 0.0
        %729 = vmatprep.subr.mxu0 0.0
        %730 = vmatpush1.msra.mxu0 0.0
        %731 = vmatprep.subr.mxu0 0.0
        %732 = vmatpush1.msra.mxu0 0.0
        %733 = vmatprep.subr.mxu0 0.0
        %734 = vmatpush1.msra.mxu0 0.0
        %735 = vmatprep.subr.mxu0 0.0
        %736 = vmatpush1.msra.mxu0 0.0
        %737 = vmatprep.subr.mxu0 0.0
        %738 = vmatpush1.msra.mxu0 0.0
        %739 = vmatprep.subr.mxu0 0.0
        %740 = vmatpush1.msra.mxu0 0.0
        %741 = vmatprep.subr.mxu0 0.0
        %742 = vmatpush1.msra.mxu0 0.0
        %743 = vmatprep.subr.mxu0 0.0
        %744 = vmatpush1.msra.mxu0 0.0
        %745 = vmatprep.subr.mxu0 0.0
        %746 = vmatpush1.msra.mxu0 0.0
        %747 = vmatprep.subr.mxu0 0.0
        %748 = vmatpush1.msra.mxu0 0.0
        %749 = vmatprep.subr.mxu0 0.0
        %750 = vmatpush1.msra.mxu0 0.0
        %751 = vmatprep.subr.mxu0 0.0
        %752 = vmatpush1.msra.mxu0 0.0
        %753 = vmatprep.subr.mxu0 0.0
        %754 = vmatpush1.msra.mxu0 0.0
        %755 = vmatprep.subr.mxu0 0.0
        %756 = vmatpush1.msra.mxu0 0.0
        %757 = vmatprep.mubr.f32.mxu0 0.0
        %758 = vmatmul.mubr.f32.gmra.mrb[0].mxu0 %v613
        %v759 = vpop.f32.mrb[0].mxu0
        %v760 = vadd.f32 0.0, %v759
        %v761 = vpop.f32.mrb[0].mxu0
        %v762 = vadd.f32 0.0, %v761
        %763 = vdwg.mxu0
        %v764 = vadd.f32 %v618, %v689
        %v765 = vadd.f32 %v619, %v691
        %v766 = vadd.f32 %v620, %v760
        %v767 = vadd.f32 %v621, %v762
        %v768 = vxor.u32 %v764, 2147483648
        %v769 = vmul.f32 %v768, 1.442695
        %v770 = vpow.pop %v769
        %v771 = vadd.f32 %v770, 1.0
        %v772 = vrcp.pop %v771
        %v773 = vmul.f32 1.0, %v772
        %v774 = vxor.u32 %v765, 2147483648
        %v775 = vmul.f32 %v774, 1.442695
        %v776 = vpow.pop %v775
        %v777 = vadd.f32 %v776, 1.0
        %v778 = vrcp.pop %v777
        %v779 = vmul.f32 1.0, %v778
        %v780 = vtanh.pop %v766
        %v781 = vxor.u32 %v767, 2147483648
        %v782 = vmul.f32 %v781, 1.442695
        %v783 = vpow.pop %v782
        %v784 = vadd.f32 %v783, 1.0
        %v785 = vrcp.pop %v784
        %v786 = vmul.f32 1.0, %v785
        %v787 = vmul.f32 %v779, %v614
        %v788 = vmul.f32 %v773, %v780
        %v789 = vadd.f32 %v787, %v788
        %v790 = vtanh.pop %v789
        %v791 = vmul.f32 %v786, %v790
        %792 = vst [vmem:[%s206] sm:$0xff] %v791
        %s793 = smul.u32 1, 4
        %s794 = smul.addr %s793, 8
        %s795 = scalar_lea.vmem [#allocation2], %s794
        %v796 = vld [vmem:[%s795] sm:$0xff]
        %v797 = vld [vmem:[%s795 + $0x8] sm:$0xff]
        %v798 = vld [vmem:[%s795 + $0x10] sm:$0xff]
        %v799 = vld [vmem:[%s795 + $0x18] sm:$0xff]
        %800 = vmatprep.subr.mxu0 %v550
        %801 = vmatpush1.msra.mxu0 %v549
        %802 = vmatprep.subr.mxu0 %v554
        %803 = vmatpush1.msra.mxu0 %v553
        %804 = vmatprep.subr.mxu0 %v558
        %805 = vmatpush1.msra.mxu0 %v557
        %806 = vmatprep.subr.mxu0 %v562
        %807 = vmatpush1.msra.mxu0 %v561
        %808 = vmatprep.subr.mxu0 %v566
        %809 = vmatpush1.msra.mxu0 %v565
        %810 = vmatprep.subr.mxu0 %v570
        %811 = vmatpush1.msra.mxu0 %v569
        %812 = vmatprep.subr.mxu0 %v574
        %813 = vmatpush1.msra.mxu0 %v573
        %814 = vmatprep.subr.mxu0 %v578
        %815 = vmatpush1.msra.mxu0 %v577
        %816 = vmatprep.subr.mxu0 %v582
        %817 = vmatpush1.msra.mxu0 %v581
        %818 = vmatprep.subr.mxu0 %v586
        %819 = vmatpush1.msra.mxu0 %v585
        %820 = vmatprep.subr.mxu0 %v590
        %821 = vmatpush1.msra.mxu0 %v589
        %822 = vmatprep.subr.mxu0 %v594
        %823 = vmatpush1.msra.mxu0 %v593
        %824 = vmatprep.subr.mxu0 %v598
        %825 = vmatpush1.msra.mxu0 %v597
        %826 = vmatprep.subr.mxu0 %v602
        %827 = vmatpush1.msra.mxu0 %v601
        %828 = vmatprep.subr.mxu0 %v606
        %829 = vmatpush1.msra.mxu0 %v605
        %830 = vmatprep.subr.mxu0 %v610
        %831 = vmatpush1.msra.mxu0 %v609
        %832 = vmatprep.subr.mxu0 0.0
        %833 = vmatpush1.msra.mxu0 0.0
        %834 = vmatprep.subr.mxu0 0.0
        %835 = vmatpush1.msra.mxu0 0.0
        %836 = vmatprep.subr.mxu0 0.0
        %837 = vmatpush1.msra.mxu0 0.0
        %838 = vmatprep.subr.mxu0 0.0
        %839 = vmatpush1.msra.mxu0 0.0
        %840 = vmatprep.subr.mxu0 0.0
        %841 = vmatpush1.msra.mxu0 0.0
        %842 = vmatprep.subr.mxu0 0.0
        %843 = vmatpush1.msra.mxu0 0.0
        %844 = vmatprep.subr.mxu0 0.0
        %845 = vmatpush1.msra.mxu0 0.0
        %846 = vmatprep.subr.mxu0 0.0
        %847 = vmatpush1.msra.mxu0 0.0
        %848 = vmatprep.subr.mxu0 0.0
        %849 = vmatpush1.msra.mxu0 0.0
        %850 = vmatprep.subr.mxu0 0.0
        %851 = vmatpush1.msra.mxu0 0.0
        %852 = vmatprep.subr.mxu0 0.0
        %853 = vmatpush1.msra.mxu0 0.0
        %854 = vmatprep.subr.mxu0 0.0
        %855 = vmatpush1.msra.mxu0 0.0
        %856 = vmatprep.subr.mxu0 0.0
        %857 = vmatpush1.msra.mxu0 0.0
        %858 = vmatprep.subr.mxu0 0.0
        %859 = vmatpush1.msra.mxu0 0.0
        %860 = vmatprep.subr.mxu0 0.0
        %861 = vmatpush1.msra.mxu0 0.0
        %862 = vmatprep.subr.mxu0 0.0
        %863 = vmatpush1.msra.mxu0 0.0
        %864 = vmatprep.mubr.f32.mxu0 0.0
        %865 = vmatmul.mubr.f32.gmra.mrb[0].mxu0 %v791
        %v866 = vpop.f32.mrb[0].mxu0
        %v867 = vadd.f32 0.0, %v866
        %v868 = vpop.f32.mrb[0].mxu0
        %v869 = vadd.f32 0.0, %v868
        %870 = vdwg.mxu0
        %871 = vmatprep.subr.mxu0 %v552
        %872 = vmatpush1.msra.mxu0 %v551
        %873 = vmatprep.subr.mxu0 %v556
        %874 = vmatpush1.msra.mxu0 %v555
        %875 = vmatprep.subr.mxu0 %v560
        %876 = vmatpush1.msra.mxu0 %v559
        %877 = vmatprep.subr.mxu0 %v564
        %878 = vmatpush1.msra.mxu0 %v563
        %879 = vmatprep.subr.mxu0 %v568
        %880 = vmatpush1.msra.mxu0 %v567
        %881 = vmatprep.subr.mxu0 %v572
        %882 = vmatpush1.msra.mxu0 %v571
        %883 = vmatprep.subr.mxu0 %v576
        %884 = vmatpush1.msra.mxu0 %v575
        %885 = vmatprep.subr.mxu0 %v580
        %886 = vmatpush1.msra.mxu0 %v579
        %887 = vmatprep.subr.mxu0 %v584
        %888 = vmatpush1.msra.mxu0 %v583
        %889 = vmatprep.subr.mxu0 %v588
        %890 = vmatpush1.msra.mxu0 %v587
        %891 = vmatprep.subr.mxu0 %v592
        %892 = vmatpush1.msra.mxu0 %v591
        %893 = vmatprep.subr.mxu0 %v596
        %894 = vmatpush1.msra.mxu0 %v595
        %895 = vmatprep.subr.mxu0 %v600
        %896 = vmatpush1.msra.mxu0 %v599
        %897 = vmatprep.subr.mxu0 %v604
        %898 = vmatpush1.msra.mxu0 %v603
        %899 = vmatprep.subr.mxu0 %v608
        %900 = vmatpush1.msra.mxu0 %v607
        %901 = vmatprep.subr.mxu0 %v612
        %902 = vmatpush1.msra.mxu0 %v611
        %903 = vmatprep.subr.mxu0 0.0
        %904 = vmatpush1.msra.mxu0 0.0
        %905 = vmatprep.subr.mxu0 0.0
        %906 = vmatpush1.msra.mxu0 0.0
        %907 = vmatprep.subr.mxu0 0.0
        %908 = vmatpush1.msra.mxu0 0.0
        %909 = vmatprep.subr.mxu0 0.0
        %910 = vmatpush1.msra.mxu0 0.0
        %911 = vmatprep.subr.mxu0 0.0
        %912 = vmatpush1.msra.mxu0 0.0
        %913 = vmatprep.subr.mxu0 0.0
        %914 = vmatpush1.msra.mxu0 0.0
        %915 = vmatprep.subr.mxu0 0.0
        %916 = vmatpush1.msra.mxu0 0.0
        %917 = vmatprep.subr.mxu0 0.0
        %918 = vmatpush1.msra.mxu0 0.0
        %919 = vmatprep.subr.mxu0 0.0
        %920 = vmatpush1.msra.mxu0 0.0
        %921 = vmatprep.subr.mxu0 0.0
        %922 = vmatpush1.msra.mxu0 0.0
        %923 = vmatprep.subr.mxu0 0.0
        %924 = vmatpush1.msra.mxu0 0.0
        %925 = vmatprep.subr.mxu0 0.0
        %926 = vmatpush1.msra.mxu0 0.0
        %927 = vmatprep.subr.mxu0 0.0
        %928 = vmatpush1.msra.mxu0 0.0
        %929 = vmatprep.subr.mxu0 0.0
        %930 = vmatpush1.msra.mxu0 0.0
        %931 = vmatprep.subr.mxu0 0.0
        %932 = vmatpush1.msra.mxu0 0.0
        %933 = vmatprep.subr.mxu0 0.0
        %934 = vmatpush1.msra.mxu0 0.0
        %935 = vmatprep.mubr.f32.mxu0 0.0
        %936 = vmatmul.mubr.f32.gmra.mrb[0].mxu0 %v791
        %v937 = vpop.f32.mrb[0].mxu0
        %v938 = vadd.f32 0.0, %v937
        %v939 = vpop.f32.mrb[0].mxu0
        %v940 = vadd.f32 0.0, %v939
        %941 = vdwg.mxu0
        %v942 = vadd.f32 %v796, %v867
        %v943 = vadd.f32 %v797, %v869
        %v944 = vadd.f32 %v798, %v938
        %v945 = vadd.f32 %v799, %v940
        %v946 = vxor.u32 %v942, 2147483648
        %v947 = vmul.f32 %v946, 1.442695
        %v948 = vpow.pop %v947
        %v949 = vadd.f32 %v948, 1.0
        %v950 = vrcp.pop %v949
        %v951 = vmul.f32 1.0, %v950
        %v952 = vxor.u32 %v943, 2147483648
        %v953 = vmul.f32 %v952, 1.442695
        %v954 = vpow.pop %v953
        %v955 = vadd.f32 %v954, 1.0
        %v956 = vrcp.pop %v955
        %v957 = vmul.f32 1.0, %v956
        %v958 = vtanh.pop %v944
        %v959 = vxor.u32 %v945, 2147483648
        %v960 = vmul.f32 %v959, 1.442695
        %v961 = vpow.pop %v960
        %v962 = vadd.f32 %v961, 1.0
        %v963 = vrcp.pop %v962
        %v964 = vmul.f32 1.0, %v963
        %v965 = vmul.f32 %v957, %v789
        %v966 = vmul.f32 %v951, %v958
        %v967 = vadd.f32 %v965, %v966
        %v968 = vtanh.pop %v967
        %v969 = vmul.f32 %v964, %v968
        %s970 = scalar_lea.vmem %s206, 8 [#allocation8]
        %971 = vst [vmem:[%s970] sm:$0xff] %v969
        %s972 = smul.u32 2, 4
        %s973 = smul.addr %s972, 8
        %s974 = scalar_lea.vmem [#allocation2], %s973
        %v975 = vld [vmem:[%s974] sm:$0xff]
        %v976 = vld [vmem:[%s974 + $0x8] sm:$0xff]
        %v977 = vld [vmem:[%s974 + $0x10] sm:$0xff]
        %v978 = vld [vmem:[%s974 + $0x18] sm:$0xff]
        %979 = vmatprep.subr.mxu0 %v550
        %980 = vmatpush1.msra.mxu0 %v549
        %981 = vmatprep.subr.mxu0 %v554
        %982 = vmatpush1.msra.mxu0 %v553
        %983 = vmatprep.subr.mxu0 %v558
        %984 = vmatpush1.msra.mxu0 %v557
        %985 = vmatprep.subr.mxu0 %v562
        %986 = vmatpush1.msra.mxu0 %v561
        %987 = vmatprep.subr.mxu0 %v566
        %988 = vmatpush1.msra.mxu0 %v565
        %989 = vmatprep.subr.mxu0 %v570
        %990 = vmatpush1.msra.mxu0 %v569
        %991 = vmatprep.subr.mxu0 %v574
        %992 = vmatpush1.msra.mxu0 %v573
        %993 = vmatprep.subr.mxu0 %v578
        %994 = vmatpush1.msra.mxu0 %v577
        %995 = vmatprep.subr.mxu0 %v582
        %996 = vmatpush1.msra.mxu0 %v581
        %997 = vmatprep.subr.mxu0 %v586
        %998 = vmatpush1.msra.mxu0 %v585
        %999 = vmatprep.subr.mxu0 %v590
        %1000 = vmatpush1.msra.mxu0 %v589
        %1001 = vmatprep.subr.mxu0 %v594
        %1002 = vmatpush1.msra.mxu0 %v593
        %1003 = vmatprep.subr.mxu0 %v598
        %1004 = vmatpush1.msra.mxu0 %v597
        %1005 = vmatprep.subr.mxu0 %v602
        %1006 = vmatpush1.msra.mxu0 %v601
        %1007 = vmatprep.subr.mxu0 %v606
        %1008 = vmatpush1.msra.mxu0 %v605
        %1009 = vmatprep.subr.mxu0 %v610
        %1010 = vmatpush1.msra.mxu0 %v609
        %1011 = vmatprep.subr.mxu0 0.0
        %1012 = vmatpush1.msra.mxu0 0.0
        %1013 = vmatprep.subr.mxu0 0.0
        %1014 = vmatpush1.msra.mxu0 0.0
        %1015 = vmatprep.subr.mxu0 0.0
        %1016 = vmatpush1.msra.mxu0 0.0
        %1017 = vmatprep.subr.mxu0 0.0
        %1018 = vmatpush1.msra.mxu0 0.0
        %1019 = vmatprep.subr.mxu0 0.0
        %1020 = vmatpush1.msra.mxu0 0.0
        %1021 = vmatprep.subr.mxu0 0.0
        %1022 = vmatpush1.msra.mxu0 0.0
        %1023 = vmatprep.subr.mxu0 0.0
        %1024 = vmatpush1.msra.mxu0 0.0
        %1025 = vmatprep.subr.mxu0 0.0
        %1026 = vmatpush1.msra.mxu0 0.0
        %1027 = vmatprep.subr.mxu0 0.0
        %1028 = vmatpush1.msra.mxu0 0.0
        %1029 = vmatprep.subr.mxu0 0.0
        %1030 = vmatpush1.msra.mxu0 0.0
        %1031 = vmatprep.subr.mxu0 0.0
        %1032 = vmatpush1.msra.mxu0 0.0
        %1033 = vmatprep.subr.mxu0 0.0
        %1034 = vmatpush1.msra.mxu0 0.0
        %1035 = vmatprep.subr.mxu0 0.0
        %1036 = vmatpush1.msra.mxu0 0.0
        %1037 = vmatprep.subr.mxu0 0.0
        %1038 = vmatpush1.msra.mxu0 0.0
        %1039 = vmatprep.subr.mxu0 0.0
        %1040 = vmatpush1.msra.mxu0 0.0
        %1041 = vmatprep.subr.mxu0 0.0
        %1042 = vmatpush1.msra.mxu0 0.0
        %1043 = vmatprep.mubr.f32.mxu0 0.0
        %1044 = vmatmul.mubr.f32.gmra.mrb[0].mxu0 %v969
        %v1045 = vpop.f32.mrb[0].mxu0
        %v1046 = vadd.f32 0.0, %v1045
        %v1047 = vpop.f32.mrb[0].mxu0
        %v1048 = vadd.f32 0.0, %v1047
        %1049 = vdwg.mxu0
        %1050 = vmatprep.subr.mxu0 %v552
        %1051 = vmatpush1.msra.mxu0 %v551
        %1052 = vmatprep.subr.mxu0 %v556
        %1053 = vmatpush1.msra.mxu0 %v555
        %1054 = vmatprep.subr.mxu0 %v560
        %1055 = vmatpush1.msra.mxu0 %v559
        %1056 = vmatprep.subr.mxu0 %v564
        %1057 = vmatpush1.msra.mxu0 %v563
        %1058 = vmatprep.subr.mxu0 %v568
        %1059 = vmatpush1.msra.mxu0 %v567
        %1060 = vmatprep.subr.mxu0 %v572
        %1061 = vmatpush1.msra.mxu0 %v571
        %1062 = vmatprep.subr.mxu0 %v576
        %1063 = vmatpush1.msra.mxu0 %v575
        %1064 = vmatprep.subr.mxu0 %v580
        %1065 = vmatpush1.msra.mxu0 %v579
        %1066 = vmatprep.subr.mxu0 %v584
        %1067 = vmatpush1.msra.mxu0 %v583
        %1068 = vmatprep.subr.mxu0 %v588
        %1069 = vmatpush1.msra.mxu0 %v587
        %1070 = vmatprep.subr.mxu0 %v592
        %1071 = vmatpush1.msra.mxu0 %v591
        %1072 = vmatprep.subr.mxu0 %v596
        %1073 = vmatpush1.msra.mxu0 %v595
        %1074 = vmatprep.subr.mxu0 %v600
        %1075 = vmatpush1.msra.mxu0 %v599
        %1076 = vmatprep.subr.mxu0 %v604
        %1077 = vmatpush1.msra.mxu0 %v603
        %1078 = vmatprep.subr.mxu0 %v608
        %1079 = vmatpush1.msra.mxu0 %v607
        %1080 = vmatprep.subr.mxu0 %v612
        %1081 = vmatpush1.msra.mxu0 %v611
        %1082 = vmatprep.subr.mxu0 0.0
        %1083 = vmatpush1.msra.mxu0 0.0
        %1084 = vmatprep.subr.mxu0 0.0
        %1085 = vmatpush1.msra.mxu0 0.0
        %1086 = vmatprep.subr.mxu0 0.0
        %1087 = vmatpush1.msra.mxu0 0.0
        %1088 = vmatprep.subr.mxu0 0.0
        %1089 = vmatpush1.msra.mxu0 0.0
        %1090 = vmatprep.subr.mxu0 0.0
        %1091 = vmatpush1.msra.mxu0 0.0
        %1092 = vmatprep.subr.mxu0 0.0
        %1093 = vmatpush1.msra.mxu0 0.0
        %1094 = vmatprep.subr.mxu0 0.0
        %1095 = vmatpush1.msra.mxu0 0.0
        %1096 = vmatprep.subr.mxu0 0.0
        %1097 = vmatpush1.msra.mxu0 0.0
        %1098 = vmatprep.subr.mxu0 0.0
        %1099 = vmatpush1.msra.mxu0 0.0
        %1100 = vmatprep.subr.mxu0 0.0
        %1101 = vmatpush1.msra.mxu0 0.0
        %1102 = vmatprep.subr.mxu0 0.0
        %1103 = vmatpush1.msra.mxu0 0.0
        %1104 = vmatprep.subr.mxu0 0.0
        %1105 = vmatpush1.msra.mxu0 0.0
        %1106 = vmatprep.subr.mxu0 0.0
        %1107 = vmatpush1.msra.mxu0 0.0
        %1108 = vmatprep.subr.mxu0 0.0
        %1109 = vmatpush1.msra.mxu0 0.0
        %1110 = vmatprep.subr.mxu0 0.0
        %1111 = vmatpush1.msra.mxu0 0.0
        %1112 = vmatprep.subr.mxu0 0.0
        %1113 = vmatpush1.msra.mxu0 0.0
        %1114 = vmatprep.mubr.f32.mxu0 0.0
        %1115 = vmatmul.mubr.f32.gmra.mrb[0].mxu0 %v969
        %v1116 = vpop.f32.mrb[0].mxu0
        %v1117 = vadd.f32 0.0, %v1116
        %v1118 = vpop.f32.mrb[0].mxu0
        %v1119 = vadd.f32 0.0, %v1118
        %1120 = vdwg.mxu0
        %v1121 = vadd.f32 %v975, %v1046
        %v1122 = vadd.f32 %v976, %v1048
        %v1123 = vadd.f32 %v977, %v1117
        %v1124 = vadd.f32 %v978, %v1119
        %v1125 = vxor.u32 %v1121, 2147483648
        %v1126 = vmul.f32 %v1125, 1.442695
        %v1127 = vpow.pop %v1126
        %v1128 = vadd.f32 %v1127, 1.0
        %v1129 = vrcp.pop %v1128
        %v1130 = vmul.f32 1.0, %v1129
        %v1131 = vxor.u32 %v1122, 2147483648
        %v1132 = vmul.f32 %v1131, 1.442695
        %v1133 = vpow.pop %v1132
        %v1134 = vadd.f32 %v1133, 1.0
        %v1135 = vrcp.pop %v1134
        %v1136 = vmul.f32 1.0, %v1135
        %v1137 = vtanh.pop %v1123
        %v1138 = vxor.u32 %v1124, 2147483648
        %v1139 = vmul.f32 %v1138, 1.442695
        %v1140 = vpow.pop %v1139
        %v1141 = vadd.f32 %v1140, 1.0
        %v1142 = vrcp.pop %v1141
        %v1143 = vmul.f32 1.0, %v1142
        %v1144 = vmul.f32 %v1136, %v967
        %v1145 = vmul.f32 %v1130, %v1137
        %v1146 = vadd.f32 %v1144, %v1145
        %v1147 = vtanh.pop %v1146
        %v1148 = vmul.f32 %v1143, %v1147
        %s1149 = scalar_lea.vmem %s206, 16 [#allocation8]
        %1150 = vst [vmem:[%s1149] sm:$0xff] %v1148
        %s1151 = smul.u32 3, 4
        %s1152 = smul.addr %s1151, 8
        %s1153 = scalar_lea.vmem [#allocation2], %s1152
        %v1154 = vld [vmem:[%s1153] sm:$0xff]
        %v1155 = vld [vmem:[%s1153 + $0x8] sm:$0xff]
        %v1156 = vld [vmem:[%s1153 + $0x10] sm:$0xff]
        %v1157 = vld [vmem:[%s1153 + $0x18] sm:$0xff]
        %1158 = vmatprep.subr.mxu0 %v550
        %1159 = vmatpush1.msra.mxu0 %v549
        %1160 = vmatprep.subr.mxu0 %v554
        %1161 = vmatpush1.msra.mxu0 %v553
        %1162 = vmatprep.subr.mxu0 %v558
        %1163 = vmatpush1.msra.mxu0 %v557
        %1164 = vmatprep.subr.mxu0 %v562
        %1165 = vmatpush1.msra.mxu0 %v561
        %1166 = vmatprep.subr.mxu0 %v566
        %1167 = vmatpush1.msra.mxu0 %v565
        %1168 = vmatprep.subr.mxu0 %v570
        %1169 = vmatpush1.msra.mxu0 %v569
        %1170 = vmatprep.subr.mxu0 %v574
        %1171 = vmatpush1.msra.mxu0 %v573
        %1172 = vmatprep.subr.mxu0 %v578
        %1173 = vmatpush1.msra.mxu0 %v577
        %1174 = vmatprep.subr.mxu0 %v582
        %1175 = vmatpush1.msra.mxu0 %v581
        %1176 = vmatprep.subr.mxu0 %v586
        %1177 = vmatpush1.msra.mxu0 %v585
        %1178 = vmatprep.subr.mxu0 %v590
        %1179 = vmatpush1.msra.mxu0 %v589
        %1180 = vmatprep.subr.mxu0 %v594
        %1181 = vmatpush1.msra.mxu0 %v593
        %1182 = vmatprep.subr.mxu0 %v598
        %1183 = vmatpush1.msra.mxu0 %v597
        %1184 = vmatprep.subr.mxu0 %v602
        %1185 = vmatpush1.msra.mxu0 %v601
        %1186 = vmatprep.subr.mxu0 %v606
        %1187 = vmatpush1.msra.mxu0 %v605
        %1188 = vmatprep.subr.mxu0 %v610
        %1189 = vmatpush1.msra.mxu0 %v609
        %1190 = vmatprep.subr.mxu0 0.0
        %1191 = vmatpush1.msra.mxu0 0.0
        %1192 = vmatprep.subr.mxu0 0.0
        %1193 = vmatpush1.msra.mxu0 0.0
        %1194 = vmatprep.subr.mxu0 0.0
        %1195 = vmatpush1.msra.mxu0 0.0
        %1196 = vmatprep.subr.mxu0 0.0
        %1197 = vmatpush1.msra.mxu0 0.0
        %1198 = vmatprep.subr.mxu0 0.0
        %1199 = vmatpush1.msra.mxu0 0.0
        %1200 = vmatprep.subr.mxu0 0.0
        %1201 = vmatpush1.msra.mxu0 0.0
        %1202 = vmatprep.subr.mxu0 0.0
        %1203 = vmatpush1.msra.mxu0 0.0
        %1204 = vmatprep.subr.mxu0 0.0
        %1205 = vmatpush1.msra.mxu0 0.0
        %1206 = vmatprep.subr.mxu0 0.0
        %1207 = vmatpush1.msra.mxu0 0.0
        %1208 = vmatprep.subr.mxu0 0.0
        %1209 = vmatpush1.msra.mxu0 0.0
        %1210 = vmatprep.subr.mxu0 0.0
        %1211 = vmatpush1.msra.mxu0 0.0
        %1212 = vmatprep.subr.mxu0 0.0
        %1213 = vmatpush1.msra.mxu0 0.0
        %1214 = vmatprep.subr.mxu0 0.0
        %1215 = vmatpush1.msra.mxu0 0.0
        %1216 = vmatprep.subr.mxu0 0.0
        %1217 = vmatpush1.msra.mxu0 0.0
        %1218 = vmatprep.subr.mxu0 0.0
        %1219 = vmatpush1.msra.mxu0 0.0
        %1220 = vmatprep.subr.mxu0 0.0
        %1221 = vmatpush1.msra.mxu0 0.0
        %1222 = vmatprep.mubr.f32.mxu0 0.0
        %1223 = vmatmul.mubr.f32.gmra.mrb[0].mxu0 %v1148
        %v1224 = vpop.f32.mrb[0].mxu0
        %v1225 = vadd.f32 0.0, %v1224
        %v1226 = vpop.f32.mrb[0].mxu0
        %v1227 = vadd.f32 0.0, %v1226
        %1228 = vdwg.mxu0
        %1229 = vmatprep.subr.mxu0 %v552
        %1230 = vmatpush1.msra.mxu0 %v551
        %1231 = vmatprep.subr.mxu0 %v556
        %1232 = vmatpush1.msra.mxu0 %v555
        %1233 = vmatprep.subr.mxu0 %v560
        %1234 = vmatpush1.msra.mxu0 %v559
        %1235 = vmatprep.subr.mxu0 %v564
        %1236 = vmatpush1.msra.mxu0 %v563
        %1237 = vmatprep.subr.mxu0 %v568
        %1238 = vmatpush1.msra.mxu0 %v567
        %1239 = vmatprep.subr.mxu0 %v572
        %1240 = vmatpush1.msra.mxu0 %v571
        %1241 = vmatprep.subr.mxu0 %v576
        %1242 = vmatpush1.msra.mxu0 %v575
        %1243 = vmatprep.subr.mxu0 %v580
        %1244 = vmatpush1.msra.mxu0 %v579
        %1245 = vmatprep.subr.mxu0 %v584
        %1246 = vmatpush1.msra.mxu0 %v583
        %1247 = vmatprep.subr.mxu0 %v588
        %1248 = vmatpush1.msra.mxu0 %v587
        %1249 = vmatprep.subr.mxu0 %v592
        %1250 = vmatpush1.msra.mxu0 %v591
        %1251 = vmatprep.subr.mxu0 %v596
        %1252 = vmatpush1.msra.mxu0 %v595
        %1253 = vmatprep.subr.mxu0 %v600
        %1254 = vmatpush1.msra.mxu0 %v599
        %1255 = vmatprep.subr.mxu0 %v604
        %1256 = vmatpush1.msra.mxu0 %v603
        %1257 = vmatprep.subr.mxu0 %v608
        %1258 = vmatpush1.msra.mxu0 %v607
        %1259 = vmatprep.subr.mxu0 %v612
        %1260 = vmatpush1.msra.mxu0 %v611
        %1261 = vmatprep.subr.mxu0 0.0
        %1262 = vmatpush1.msra.mxu0 0.0
        %1263 = vmatprep.subr.mxu0 0.0
        %1264 = vmatpush1.msra.mxu0 0.0
        %1265 = vmatprep.subr.mxu0 0.0
        %1266 = vmatpush1.msra.mxu0 0.0
        %1267 = vmatprep.subr.mxu0 0.0
        %1268 = vmatpush1.msra.mxu0 0.0
        %1269 = vmatprep.subr.mxu0 0.0
        %1270 = vmatpush1.msra.mxu0 0.0
        %1271 = vmatprep.subr.mxu0 0.0
        %1272 = vmatpush1.msra.mxu0 0.0
        %1273 = vmatprep.subr.mxu0 0.0
        %1274 = vmatpush1.msra.mxu0 0.0
        %1275 = vmatprep.subr.mxu0 0.0
        %1276 = vmatpush1.msra.mxu0 0.0
        %1277 = vmatprep.subr.mxu0 0.0
        %1278 = vmatpush1.msra.mxu0 0.0
        %1279 = vmatprep.subr.mxu0 0.0
        %1280 = vmatpush1.msra.mxu0 0.0
        %1281 = vmatprep.subr.mxu0 0.0
        %1282 = vmatpush1.msra.mxu0 0.0
        %1283 = vmatprep.subr.mxu0 0.0
        %1284 = vmatpush1.msra.mxu0 0.0
        %1285 = vmatprep.subr.mxu0 0.0
        %1286 = vmatpush1.msra.mxu0 0.0
        %1287 = vmatprep.subr.mxu0 0.0
        %1288 = vmatpush1.msra.mxu0 0.0
        %1289 = vmatprep.subr.mxu0 0.0
        %1290 = vmatpush1.msra.mxu0 0.0
        %1291 = vmatprep.subr.mxu0 0.0
        %1292 = vmatpush1.msra.mxu0 0.0
        %1293 = vmatprep.mubr.f32.mxu0 0.0
        %1294 = vmatmul.mubr.f32.gmra.mrb[0].mxu0 %v1148
        %v1295 = vpop.f32.mrb[0].mxu0
        %v1296 = vadd.f32 0.0, %v1295
        %v1297 = vpop.f32.mrb[0].mxu0
        %v1298 = vadd.f32 0.0, %v1297
        %1299 = vdwg.mxu0
        %v1300 = vadd.f32 %v1154, %v1225
        %v1301 = vadd.f32 %v1155, %v1227
        %v1302 = vadd.f32 %v1156, %v1296
        %v1303 = vadd.f32 %v1157, %v1298
        %v1304 = vxor.u32 %v1300, 2147483648
        %v1305 = vmul.f32 %v1304, 1.442695
        %v1306 = vpow.pop %v1305
        %v1307 = vadd.f32 %v1306, 1.0
        %v1308 = vrcp.pop %v1307
        %v1309 = vmul.f32 1.0, %v1308
        %v1310 = vxor.u32 %v1301, 2147483648
        %v1311 = vmul.f32 %v1310, 1.442695
        %v1312 = vpow.pop %v1311
        %v1313 = vadd.f32 %v1312, 1.0
        %v1314 = vrcp.pop %v1313
        %v1315 = vmul.f32 1.0, %v1314
        %v1316 = vtanh.pop %v1302
        %v1317 = vxor.u32 %v1303, 2147483648
        %v1318 = vmul.f32 %v1317, 1.442695
        %v1319 = vpow.pop %v1318
        %v1320 = vadd.f32 %v1319, 1.0
        %v1321 = vrcp.pop %v1320
        %v1322 = vmul.f32 1.0, %v1321
        %v1323 = vmul.f32 %v1315, %v1146
        %v1324 = vmul.f32 %v1309, %v1316
        %v1325 = vadd.f32 %v1323, %v1324
        %v1326 = vtanh.pop %v1325
        %v1327 = vmul.f32 %v1322, %v1326
        %s1328 = scalar_lea.vmem %s206, 24 [#allocation8]
        %1329 = vst [vmem:[%s1328] sm:$0xff] %v1327
        %s1330 = smul.u32 4, 4
        %s1331 = smul.addr %s1330, 8
        %s1332 = scalar_lea.vmem [#allocation2], %s1331
        %v1333 = vld [vmem:[%s1332] sm:$0xff]
        %v1334 = vld [vmem:[%s1332 + $0x8] sm:$0xff]
        %v1335 = vld [vmem:[%s1332 + $0x10] sm:$0xff]
        %v1336 = vld [vmem:[%s1332 + $0x18] sm:$0xff]
        %1337 = vmatprep.subr.mxu0 %v550
        %1338 = vmatpush1.msra.mxu0 %v549
        %1339 = vmatprep.subr.mxu0 %v554
        %1340 = vmatpush1.msra.mxu0 %v553
        %1341 = vmatprep.subr.mxu0 %v558
        %1342 = vmatpush1.msra.mxu0 %v557
        %1343 = vmatprep.subr.mxu0 %v562
        %1344 = vmatpush1.msra.mxu0 %v561
        %1345 = vmatprep.subr.mxu0 %v566
        %1346 = vmatpush1.msra.mxu0 %v565
        %1347 = vmatprep.subr.mxu0 %v570
        %1348 = vmatpush1.msra.mxu0 %v569
        %1349 = vmatprep.subr.mxu0 %v574
        %1350 = vmatpush1.msra.mxu0 %v573
        %1351 = vmatprep.subr.mxu0 %v578
        %1352 = vmatpush1.msra.mxu0 %v577
        %1353 = vmatprep.subr.mxu0 %v582
        %1354 = vmatpush1.msra.mxu0 %v581
        %1355 = vmatprep.subr.mxu0 %v586
        %1356 = vmatpush1.msra.mxu0 %v585
        %1357 = vmatprep.subr.mxu0 %v590
        %1358 = vmatpush1.msra.mxu0 %v589
        %1359 = vmatprep.subr.mxu0 %v594
        %1360 = vmatpush1.msra.mxu0 %v593
        %1361 = vmatprep.subr.mxu0 %v598
        %1362 = vmatpush1.msra.mxu0 %v597
        %1363 = vmatprep.subr.mxu0 %v602
        %1364 = vmatpush1.msra.mxu0 %v601
        %1365 = vmatprep.subr.mxu0 %v606
        %1366 = vmatpush1.msra.mxu0 %v605
        %1367 = vmatprep.subr.mxu0 %v610
        %1368 = vmatpush1.msra.mxu0 %v609
        %1369 = vmatprep.subr.mxu0 0.0
        %1370 = vmatpush1.msra.mxu0 0.0
        %1371 = vmatprep.subr.mxu0 0.0
        %1372 = vmatpush1.msra.mxu0 0.0
        %1373 = vmatprep.subr.mxu0 0.0
        %1374 = vmatpush1.msra.mxu0 0.0
        %1375 = vmatprep.subr.mxu0 0.0
        %1376 = vmatpush1.msra.mxu0 0.0
        %1377 = vmatprep.subr.mxu0 0.0
        %1378 = vmatpush1.msra.mxu0 0.0
        %1379 = vmatprep.subr.mxu0 0.0
        %1380 = vmatpush1.msra.mxu0 0.0
        %1381 = vmatprep.subr.mxu0 0.0
        %1382 = vmatpush1.msra.mxu0 0.0
        %1383 = vmatprep.subr.mxu0 0.0
        %1384 = vmatpush1.msra.mxu0 0.0
        %1385 = vmatprep.subr.mxu0 0.0
        %1386 = vmatpush1.msra.mxu0 0.0
        %1387 = vmatprep.subr.mxu0 0.0
        %1388 = vmatpush1.msra.mxu0 0.0
        %1389 = vmatprep.subr.mxu0 0.0
        %1390 = vmatpush1.msra.mxu0 0.0
        %1391 = vmatprep.subr.mxu0 0.0
        %1392 = vmatpush1.msra.mxu0 0.0
        %1393 = vmatprep.subr.mxu0 0.0
        %1394 = vmatpush1.msra.mxu0 0.0
        %1395 = vmatprep.subr.mxu0 0.0
        %1396 = vmatpush1.msra.mxu0 0.0
        %1397 = vmatprep.subr.mxu0 0.0
        %1398 = vmatpush1.msra.mxu0 0.0
        %1399 = vmatprep.subr.mxu0 0.0
        %1400 = vmatpush1.msra.mxu0 0.0
        %1401 = vmatprep.mubr.f32.mxu0 0.0
        %1402 = vmatmul.mubr.f32.gmra.mrb[0].mxu0 %v1327
        %v1403 = vpop.f32.mrb[0].mxu0
        %v1404 = vadd.f32 0.0, %v1403
        %v1405 = vpop.f32.mrb[0].mxu0
        %v1406 = vadd.f32 0.0, %v1405
        %1407 = vdwg.mxu0
        %1408 = vmatprep.subr.mxu0 %v552
        %1409 = vmatpush1.msra.mxu0 %v551
        %1410 = vmatprep.subr.mxu0 %v556
        %1411 = vmatpush1.msra.mxu0 %v555
        %1412 = vmatprep.subr.mxu0 %v560
        %1413 = vmatpush1.msra.mxu0 %v559
        %1414 = vmatprep.subr.mxu0 %v564
        %1415 = vmatpush1.msra.mxu0 %v563
        %1416 = vmatprep.subr.mxu0 %v568
        %1417 = vmatpush1.msra.mxu0 %v567
        %1418 = vmatprep.subr.mxu0 %v572
        %1419 = vmatpush1.msra.mxu0 %v571
        %1420 = vmatprep.subr.mxu0 %v576
        %1421 = vmatpush1.msra.mxu0 %v575
        %1422 = vmatprep.subr.mxu0 %v580
        %1423 = vmatpush1.msra.mxu0 %v579
        %1424 = vmatprep.subr.mxu0 %v584
        %1425 = vmatpush1.msra.mxu0 %v583
        %1426 = vmatprep.subr.mxu0 %v588
        %1427 = vmatpush1.msra.mxu0 %v587
        %1428 = vmatprep.subr.mxu0 %v592
        %1429 = vmatpush1.msra.mxu0 %v591
        %1430 = vmatprep.subr.mxu0 %v596
        %1431 = vmatpush1.msra.mxu0 %v595
        %1432 = vmatprep.subr.mxu0 %v600
        %1433 = vmatpush1.msra.mxu0 %v599
        %1434 = vmatprep.subr.mxu0 %v604
        %1435 = vmatpush1.msra.mxu0 %v603
        %1436 = vmatprep.subr.mxu0 %v608
        %1437 = vmatpush1.msra.mxu0 %v607
        %1438 = vmatprep.subr.mxu0 %v612
        %1439 = vmatpush1.msra.mxu0 %v611
        %1440 = vmatprep.subr.mxu0 0.0
        %1441 = vmatpush1.msra.mxu0 0.0
        %1442 = vmatprep.subr.mxu0 0.0
        %1443 = vmatpush1.msra.mxu0 0.0
        %1444 = vmatprep.subr.mxu0 0.0
        %1445 = vmatpush1.msra.mxu0 0.0
        %1446 = vmatprep.subr.mxu0 0.0
        %1447 = vmatpush1.msra.mxu0 0.0
        %1448 = vmatprep.subr.mxu0 0.0
        %1449 = vmatpush1.msra.mxu0 0.0
        %1450 = vmatprep.subr.mxu0 0.0
        %1451 = vmatpush1.msra.mxu0 0.0
        %1452 = vmatprep.subr.mxu0 0.0
        %1453 = vmatpush1.msra.mxu0 0.0
        %1454 = vmatprep.subr.mxu0 0.0
        %1455 = vmatpush1.msra.mxu0 0.0
        %1456 = vmatprep.subr.mxu0 0.0
        %1457 = vmatpush1.msra.mxu0 0.0
        %1458 = vmatprep.subr.mxu0 0.0
        %1459 = vmatpush1.msra.mxu0 0.0
        %1460 = vmatprep.subr.mxu0 0.0
        %1461 = vmatpush1.msra.mxu0 0.0
        %1462 = vmatprep.subr.mxu0 0.0
        %1463 = vmatpush1.msra.mxu0 0.0
        %1464 = vmatprep.subr.mxu0 0.0
        %1465 = vmatpush1.msra.mxu0 0.0
        %1466 = vmatprep.subr.mxu0 0.0
        %1467 = vmatpush1.msra.mxu0 0.0
        %1468 = vmatprep.subr.mxu0 0.0
        %1469 = vmatpush1.msra.mxu0 0.0
        %1470 = vmatprep.subr.mxu0 0.0
        %1471 = vmatpush1.msra.mxu0 0.0
        %1472 = vmatprep.mubr.f32.mxu0 0.0
        %1473 = vmatmul.mubr.f32.gmra.mrb[0].mxu0 %v1327
        %v1474 = vpop.f32.mrb[0].mxu0
        %v1475 = vadd.f32 0.0, %v1474
        %v1476 = vpop.f32.mrb[0].mxu0
        %v1477 = vadd.f32 0.0, %v1476
        %1478 = vdwg.mxu0
        %v1479 = vadd.f32 %v1333, %v1404
        %v1480 = vadd.f32 %v1334, %v1406
        %v1481 = vadd.f32 %v1335, %v1475
        %v1482 = vadd.f32 %v1336, %v1477
        %v1483 = vxor.u32 %v1479, 2147483648
        %v1484 = vmul.f32 %v1483, 1.442695
        %v1485 = vpow.pop %v1484
        %v1486 = vadd.f32 %v1485, 1.0
        %v1487 = vrcp.pop %v1486
        %v1488 = vmul.f32 1.0, %v1487
        %v1489 = vxor.u32 %v1480, 2147483648
        %v1490 = vmul.f32 %v1489, 1.442695
        %v1491 = vpow.pop %v1490
        %v1492 = vadd.f32 %v1491, 1.0
        %v1493 = vrcp.pop %v1492
        %v1494 = vmul.f32 1.0, %v1493
        %v1495 = vtanh.pop %v1481
        %v1496 = vxor.u32 %v1482, 2147483648
        %v1497 = vmul.f32 %v1496, 1.442695
        %v1498 = vpow.pop %v1497
        %v1499 = vadd.f32 %v1498, 1.0
        %v1500 = vrcp.pop %v1499
        %v1501 = vmul.f32 1.0, %v1500
        %v1502 = vmul.f32 %v1494, %v1325
        %v1503 = vmul.f32 %v1488, %v1495
        %v1504 = vadd.f32 %v1502, %v1503
        %v1505 = vtanh.pop %v1504
        %v1506 = vmul.f32 %v1501, %v1505
        %s1507 = scalar_lea.vmem %s206, 32 [#allocation8]
        %1508 = vst [vmem:[%s1507] sm:$0xff] %v1506
        %s1509 = smul.u32 5, 4
        %s1510 = smul.addr %s1509, 8
        %s1511 = scalar_lea.vmem [#allocation2], %s1510
        %v1512 = vld [vmem:[%s1511] sm:$0xff]
        %v1513 = vld [vmem:[%s1511 + $0x8] sm:$0xff]
        %v1514 = vld [vmem:[%s1511 + $0x10] sm:$0xff]
        %v1515 = vld [vmem:[%s1511 + $0x18] sm:$0xff]
        %1516 = vmatprep.subr.mxu0 %v550
        %1517 = vmatpush1.msra.mxu0 %v549
        %1518 = vmatprep.subr.mxu0 %v554
        %1519 = vmatpush1.msra.mxu0 %v553
        %1520 = vmatprep.subr.mxu0 %v558
        %1521 = vmatpush1.msra.mxu0 %v557
        %1522 = vmatprep.subr.mxu0 %v562
        %1523 = vmatpush1.msra.mxu0 %v561
        %1524 = vmatprep.subr.mxu0 %v566
        %1525 = vmatpush1.msra.mxu0 %v565
        %1526 = vmatprep.subr.mxu0 %v570
        %1527 = vmatpush1.msra.mxu0 %v569
        %1528 = vmatprep.subr.mxu0 %v574
        %1529 = vmatpush1.msra.mxu0 %v573
        %1530 = vmatprep.subr.mxu0 %v578
        %1531 = vmatpush1.msra.mxu0 %v577
        %1532 = vmatprep.subr.mxu0 %v582
        %1533 = vmatpush1.msra.mxu0 %v581
        %1534 = vmatprep.subr.mxu0 %v586
        %1535 = vmatpush1.msra.mxu0 %v585
        %1536 = vmatprep.subr.mxu0 %v590
        %1537 = vmatpush1.msra.mxu0 %v589
        %1538 = vmatprep.subr.mxu0 %v594
        %1539 = vmatpush1.msra.mxu0 %v593
        %1540 = vmatprep.subr.mxu0 %v598
        %1541 = vmatpush1.msra.mxu0 %v597
        %1542 = vmatprep.subr.mxu0 %v602
        %1543 = vmatpush1.msra.mxu0 %v601
        %1544 = vmatprep.subr.mxu0 %v606
        %1545 = vmatpush1.msra.mxu0 %v605
        %1546 = vmatprep.subr.mxu0 %v610
        %1547 = vmatpush1.msra.mxu0 %v609
        %1548 = vmatprep.subr.mxu0 0.0
        %1549 = vmatpush1.msra.mxu0 0.0
        %1550 = vmatprep.subr.mxu0 0.0
        %1551 = vmatpush1.msra.mxu0 0.0
        %1552 = vmatprep.subr.mxu0 0.0
        %1553 = vmatpush1.msra.mxu0 0.0
        %1554 = vmatprep.subr.mxu0 0.0
        %1555 = vmatpush1.msra.mxu0 0.0
        %1556 = vmatprep.subr.mxu0 0.0
        %1557 = vmatpush1.msra.mxu0 0.0
        %1558 = vmatprep.subr.mxu0 0.0
        %1559 = vmatpush1.msra.mxu0 0.0
        %1560 = vmatprep.subr.mxu0 0.0
        %1561 = vmatpush1.msra.mxu0 0.0
        %1562 = vmatprep.subr.mxu0 0.0
        %1563 = vmatpush1.msra.mxu0 0.0
        %1564 = vmatprep.subr.mxu0 0.0
        %1565 = vmatpush1.msra.mxu0 0.0
        %1566 = vmatprep.subr.mxu0 0.0
        %1567 = vmatpush1.msra.mxu0 0.0
        %1568 = vmatprep.subr.mxu0 0.0
        %1569 = vmatpush1.msra.mxu0 0.0
        %1570 = vmatprep.subr.mxu0 0.0
        %1571 = vmatpush1.msra.mxu0 0.0
        %1572 = vmatprep.subr.mxu0 0.0
        %1573 = vmatpush1.msra.mxu0 0.0
        %1574 = vmatprep.subr.mxu0 0.0
        %1575 = vmatpush1.msra.mxu0 0.0
        %1576 = vmatprep.subr.mxu0 0.0
        %1577 = vmatpush1.msra.mxu0 0.0
        %1578 = vmatprep.subr.mxu0 0.0
        %1579 = vmatpush1.msra.mxu0 0.0
        %1580 = vmatprep.mubr.f32.mxu0 0.0
        %1581 = vmatmul.mubr.f32.gmra.mrb[0].mxu0 %v1506
        %v1582 = vpop.f32.mrb[0].mxu0
        %v1583 = vadd.f32 0.0, %v1582
        %v1584 = vpop.f32.mrb[0].mxu0
        %v1585 = vadd.f32 0.0, %v1584
        %1586 = vdwg.mxu0
        %1587 = vmatprep.subr.mxu0 %v552
        %1588 = vmatpush1.msra.mxu0 %v551
        %1589 = vmatprep.subr.mxu0 %v556
        %1590 = vmatpush1.msra.mxu0 %v555
        %1591 = vmatprep.subr.mxu0 %v560
        %1592 = vmatpush1.msra.mxu0 %v559
        %1593 = vmatprep.subr.mxu0 %v564
        %1594 = vmatpush1.msra.mxu0 %v563
        %1595 = vmatprep.subr.mxu0 %v568
        %1596 = vmatpush1.msra.mxu0 %v567
        %1597 = vmatprep.subr.mxu0 %v572
        %1598 = vmatpush1.msra.mxu0 %v571
        %1599 = vmatprep.subr.mxu0 %v576
        %1600 = vmatpush1.msra.mxu0 %v575
        %1601 = vmatprep.subr.mxu0 %v580
        %1602 = vmatpush1.msra.mxu0 %v579
        %1603 = vmatprep.subr.mxu0 %v584
        %1604 = vmatpush1.msra.mxu0 %v583
        %1605 = vmatprep.subr.mxu0 %v588
        %1606 = vmatpush1.msra.mxu0 %v587
        %1607 = vmatprep.subr.mxu0 %v592
        %1608 = vmatpush1.msra.mxu0 %v591
        %1609 = vmatprep.subr.mxu0 %v596
        %1610 = vmatpush1.msra.mxu0 %v595
        %1611 = vmatprep.subr.mxu0 %v600
        %1612 = vmatpush1.msra.mxu0 %v599
        %1613 = vmatprep.subr.mxu0 %v604
        %1614 = vmatpush1.msra.mxu0 %v603
        %1615 = vmatprep.subr.mxu0 %v608
        %1616 = vmatpush1.msra.mxu0 %v607
        %1617 = vmatprep.subr.mxu0 %v612
        %1618 = vmatpush1.msra.mxu0 %v611
        %1619 = vmatprep.subr.mxu0 0.0
        %1620 = vmatpush1.msra.mxu0 0.0
        %1621 = vmatprep.subr.mxu0 0.0
        %1622 = vmatpush1.msra.mxu0 0.0
        %1623 = vmatprep.subr.mxu0 0.0
        %1624 = vmatpush1.msra.mxu0 0.0
        %1625 = vmatprep.subr.mxu0 0.0
        %1626 = vmatpush1.msra.mxu0 0.0
        %1627 = vmatprep.subr.mxu0 0.0
        %1628 = vmatpush1.msra.mxu0 0.0
        %1629 = vmatprep.subr.mxu0 0.0
        %1630 = vmatpush1.msra.mxu0 0.0
        %1631 = vmatprep.subr.mxu0 0.0
        %1632 = vmatpush1.msra.mxu0 0.0
        %1633 = vmatprep.subr.mxu0 0.0
        %1634 = vmatpush1.msra.mxu0 0.0
        %1635 = vmatprep.subr.mxu0 0.0
        %1636 = vmatpush1.msra.mxu0 0.0
        %1637 = vmatprep.subr.mxu0 0.0
        %1638 = vmatpush1.msra.mxu0 0.0
        %1639 = vmatprep.subr.mxu0 0.0
        %1640 = vmatpush1.msra.mxu0 0.0
        %1641 = vmatprep.subr.mxu0 0.0
        %1642 = vmatpush1.msra.mxu0 0.0
        %1643 = vmatprep.subr.mxu0 0.0
        %1644 = vmatpush1.msra.mxu0 0.0
        %1645 = vmatprep.subr.mxu0 0.0
        %1646 = vmatpush1.msra.mxu0 0.0
        %1647 = vmatprep.subr.mxu0 0.0
        %1648 = vmatpush1.msra.mxu0 0.0
        %1649 = vmatprep.subr.mxu0 0.0
        %1650 = vmatpush1.msra.mxu0 0.0
        %1651 = vmatprep.mubr.f32.mxu0 0.0
        %1652 = vmatmul.mubr.f32.gmra.mrb[0].mxu0 %v1506
        %v1653 = vpop.f32.mrb[0].mxu0
        %v1654 = vadd.f32 0.0, %v1653
        %v1655 = vpop.f32.mrb[0].mxu0
        %v1656 = vadd.f32 0.0, %v1655
        %1657 = vdwg.mxu0
        %v1658 = vadd.f32 %v1512, %v1583
        %v1659 = vadd.f32 %v1513, %v1585
        %v1660 = vadd.f32 %v1514, %v1654
        %v1661 = vadd.f32 %v1515, %v1656
        %v1662 = vxor.u32 %v1658, 2147483648
        %v1663 = vmul.f32 %v1662, 1.442695
        %v1664 = vpow.pop %v1663
        %v1665 = vadd.f32 %v1664, 1.0
        %v1666 = vrcp.pop %v1665
        %v1667 = vmul.f32 1.0, %v1666
        %v1668 = vxor.u32 %v1659, 2147483648
        %v1669 = vmul.f32 %v1668, 1.442695
        %v1670 = vpow.pop %v1669
        %v1671 = vadd.f32 %v1670, 1.0
        %v1672 = vrcp.pop %v1671
        %v1673 = vmul.f32 1.0, %v1672
        %v1674 = vtanh.pop %v1660
        %v1675 = vxor.u32 %v1661, 2147483648
        %v1676 = vmul.f32 %v1675, 1.442695
        %v1677 = vpow.pop %v1676
        %v1678 = vadd.f32 %v1677, 1.0
        %v1679 = vrcp.pop %v1678
        %v1680 = vmul.f32 1.0, %v1679
        %v1681 = vmul.f32 %v1673, %v1504
        %v1682 = vmul.f32 %v1667, %v1674
        %v1683 = vadd.f32 %v1681, %v1682
        %v1684 = vtanh.pop %v1683
        %v1685 = vmul.f32 %v1680, %v1684
        %s1686 = scalar_lea.vmem %s206, 40 [#allocation8]
        %1687 = vst [vmem:[%s1686] sm:$0xff] %v1685
        %s1688 = smul.u32 6, 4
        %s1689 = smul.addr %s1688, 8
        %s1690 = scalar_lea.vmem [#allocation2], %s1689
        %v1691 = vld [vmem:[%s1690] sm:$0xff]
        %v1692 = vld [vmem:[%s1690 + $0x8] sm:$0xff]
        %v1693 = vld [vmem:[%s1690 + $0x10] sm:$0xff]
        %v1694 = vld [vmem:[%s1690 + $0x18] sm:$0xff]
        %1695 = vmatprep.subr.mxu0 %v550
        %1696 = vmatpush1.msra.mxu0 %v549
        %1697 = vmatprep.subr.mxu0 %v554
        %1698 = vmatpush1.msra.mxu0 %v553
        %1699 = vmatprep.subr.mxu0 %v558
        %1700 = vmatpush1.msra.mxu0 %v557
        %1701 = vmatprep.subr.mxu0 %v562
        %1702 = vmatpush1.msra.mxu0 %v561
        %1703 = vmatprep.subr.mxu0 %v566
        %1704 = vmatpush1.msra.mxu0 %v565
        %1705 = vmatprep.subr.mxu0 %v570
        %1706 = vmatpush1.msra.mxu0 %v569
        %1707 = vmatprep.subr.mxu0 %v574
        %1708 = vmatpush1.msra.mxu0 %v573
        %1709 = vmatprep.subr.mxu0 %v578
        %1710 = vmatpush1.msra.mxu0 %v577
        %1711 = vmatprep.subr.mxu0 %v582
        %1712 = vmatpush1.msra.mxu0 %v581
        %1713 = vmatprep.subr.mxu0 %v586
        %1714 = vmatpush1.msra.mxu0 %v585
        %1715 = vmatprep.subr.mxu0 %v590
        %1716 = vmatpush1.msra.mxu0 %v589
        %1717 = vmatprep.subr.mxu0 %v594
        %1718 = vmatpush1.msra.mxu0 %v593
        %1719 = vmatprep.subr.mxu0 %v598
        %1720 = vmatpush1.msra.mxu0 %v597
        %1721 = vmatprep.subr.mxu0 %v602
        %1722 = vmatpush1.msra.mxu0 %v601
        %1723 = vmatprep.subr.mxu0 %v606
        %1724 = vmatpush1.msra.mxu0 %v605
        %1725 = vmatprep.subr.mxu0 %v610
        %1726 = vmatpush1.msra.mxu0 %v609
        %1727 = vmatprep.subr.mxu0 0.0
        %1728 = vmatpush1.msra.mxu0 0.0
        %1729 = vmatprep.subr.mxu0 0.0
        %1730 = vmatpush1.msra.mxu0 0.0
        %1731 = vmatprep.subr.mxu0 0.0
        %1732 = vmatpush1.msra.mxu0 0.0
        %1733 = vmatprep.subr.mxu0 0.0
        %1734 = vmatpush1.msra.mxu0 0.0
        %1735 = vmatprep.subr.mxu0 0.0
        %1736 = vmatpush1.msra.mxu0 0.0
        %1737 = vmatprep.subr.mxu0 0.0
        %1738 = vmatpush1.msra.mxu0 0.0
        %1739 = vmatprep.subr.mxu0 0.0
        %1740 = vmatpush1.msra.mxu0 0.0
        %1741 = vmatprep.subr.mxu0 0.0
        %1742 = vmatpush1.msra.mxu0 0.0
        %1743 = vmatprep.subr.mxu0 0.0
        %1744 = vmatpush1.msra.mxu0 0.0
        %1745 = vmatprep.subr.mxu0 0.0
        %1746 = vmatpush1.msra.mxu0 0.0
        %1747 = vmatprep.subr.mxu0 0.0
        %1748 = vmatpush1.msra.mxu0 0.0
        %1749 = vmatprep.subr.mxu0 0.0
        %1750 = vmatpush1.msra.mxu0 0.0
        %1751 = vmatprep.subr.mxu0 0.0
        %1752 = vmatpush1.msra.mxu0 0.0
        %1753 = vmatprep.subr.mxu0 0.0
        %1754 = vmatpush1.msra.mxu0 0.0
        %1755 = vmatprep.subr.mxu0 0.0
        %1756 = vmatpush1.msra.mxu0 0.0
        %1757 = vmatprep.subr.mxu0 0.0
        %1758 = vmatpush1.msra.mxu0 0.0
        %1759 = vmatprep.mubr.f32.mxu0 0.0
        %1760 = vmatmul.mubr.f32.gmra.mrb[0].mxu0 %v1685
        %v1761 = vpop.f32.mrb[0].mxu0
        %v1762 = vadd.f32 0.0, %v1761
        %v1763 = vpop.f32.mrb[0].mxu0
        %v1764 = vadd.f32 0.0, %v1763
        %1765 = vdwg.mxu0
        %1766 = vmatprep.subr.mxu0 %v552
        %1767 = vmatpush1.msra.mxu0 %v551
        %1768 = vmatprep.subr.mxu0 %v556
        %1769 = vmatpush1.msra.mxu0 %v555
        %1770 = vmatprep.subr.mxu0 %v560
        %1771 = vmatpush1.msra.mxu0 %v559
        %1772 = vmatprep.subr.mxu0 %v564
        %1773 = vmatpush1.msra.mxu0 %v563
        %1774 = vmatprep.subr.mxu0 %v568
        %1775 = vmatpush1.msra.mxu0 %v567
        %1776 = vmatprep.subr.mxu0 %v572
        %1777 = vmatpush1.msra.mxu0 %v571
        %1778 = vmatprep.subr.mxu0 %v576
        %1779 = vmatpush1.msra.mxu0 %v575
        %1780 = vmatprep.subr.mxu0 %v580
        %1781 = vmatpush1.msra.mxu0 %v579
        %1782 = vmatprep.subr.mxu0 %v584
        %1783 = vmatpush1.msra.mxu0 %v583
        %1784 = vmatprep.subr.mxu0 %v588
        %1785 = vmatpush1.msra.mxu0 %v587
        %1786 = vmatprep.subr.mxu0 %v592
        %1787 = vmatpush1.msra.mxu0 %v591
        %1788 = vmatprep.subr.mxu0 %v596
        %1789 = vmatpush1.msra.mxu0 %v595
        %1790 = vmatprep.subr.mxu0 %v600
        %1791 = vmatpush1.msra.mxu0 %v599
        %1792 = vmatprep.subr.mxu0 %v604
        %1793 = vmatpush1.msra.mxu0 %v603
        %1794 = vmatprep.subr.mxu0 %v608
        %1795 = vmatpush1.msra.mxu0 %v607
        %1796 = vmatprep.subr.mxu0 %v612
        %1797 = vmatpush1.msra.mxu0 %v611
        %1798 = vmatprep.subr.mxu0 0.0
        %1799 = vmatpush1.msra.mxu0 0.0
        %1800 = vmatprep.subr.mxu0 0.0
        %1801 = vmatpush1.msra.mxu0 0.0
        %1802 = vmatprep.subr.mxu0 0.0
        %1803 = vmatpush1.msra.mxu0 0.0
        %1804 = vmatprep.subr.mxu0 0.0
        %1805 = vmatpush1.msra.mxu0 0.0
        %1806 = vmatprep.subr.mxu0 0.0
        %1807 = vmatpush1.msra.mxu0 0.0
        %1808 = vmatprep.subr.mxu0 0.0
        %1809 = vmatpush1.msra.mxu0 0.0
        %1810 = vmatprep.subr.mxu0 0.0
        %1811 = vmatpush1.msra.mxu0 0.0
        %1812 = vmatprep.subr.mxu0 0.0
        %1813 = vmatpush1.msra.mxu0 0.0
        %1814 = vmatprep.subr.mxu0 0.0
        %1815 = vmatpush1.msra.mxu0 0.0
        %1816 = vmatprep.subr.mxu0 0.0
        %1817 = vmatpush1.msra.mxu0 0.0
        %1818 = vmatprep.subr.mxu0 0.0
        %1819 = vmatpush1.msra.mxu0 0.0
        %1820 = vmatprep.subr.mxu0 0.0
        %1821 = vmatpush1.msra.mxu0 0.0
        %1822 = vmatprep.subr.mxu0 0.0
        %1823 = vmatpush1.msra.mxu0 0.0
        %1824 = vmatprep.subr.mxu0 0.0
        %1825 = vmatpush1.msra.mxu0 0.0
        %1826 = vmatprep.subr.mxu0 0.0
        %1827 = vmatpush1.msra.mxu0 0.0
        %1828 = vmatprep.subr.mxu0 0.0
        %1829 = vmatpush1.msra.mxu0 0.0
        %1830 = vmatprep.mubr.f32.mxu0 0.0
        %1831 = vmatmul.mubr.f32.gmra.mrb[0].mxu0 %v1685
        %v1832 = vpop.f32.mrb[0].mxu0
        %v1833 = vadd.f32 0.0, %v1832
        %v1834 = vpop.f32.mrb[0].mxu0
        %v1835 = vadd.f32 0.0, %v1834
        %1836 = vdwg.mxu0
        %v1837 = vadd.f32 %v1691, %v1762
        %v1838 = vadd.f32 %v1692, %v1764
        %v1839 = vadd.f32 %v1693, %v1833
        %v1840 = vadd.f32 %v1694, %v1835
        %v1841 = vxor.u32 %v1837, 2147483648
        %v1842 = vmul.f32 %v1841, 1.442695
        %v1843 = vpow.pop %v1842
        %v1844 = vadd.f32 %v1843, 1.0
        %v1845 = vrcp.pop %v1844
        %v1846 = vmul.f32 1.0, %v1845
        %v1847 = vxor.u32 %v1838, 2147483648
        %v1848 = vmul.f32 %v1847, 1.442695
        %v1849 = vpow.pop %v1848
        %v1850 = vadd.f32 %v1849, 1.0
        %v1851 = vrcp.pop %v1850
        %v1852 = vmul.f32 1.0, %v1851
        %v1853 = vtanh.pop %v1839
        %v1854 = vxor.u32 %v1840, 2147483648
        %v1855 = vmul.f32 %v1854, 1.442695
        %v1856 = vpow.pop %v1855
        %v1857 = vadd.f32 %v1856, 1.0
        %v1858 = vrcp.pop %v1857
        %v1859 = vmul.f32 1.0, %v1858
        %v1860 = vmul.f32 %v1852, %v1683
        %v1861 = vmul.f32 %v1846, %v1853
        %v1862 = vadd.f32 %v1860, %v1861
        %v1863 = vtanh.pop %v1862
        %v1864 = vmul.f32 %v1859, %v1863
        %s1865 = scalar_lea.vmem %s206, 48 [#allocation8]
        %1866 = vst [vmem:[%s1865] sm:$0xff] %v1864
        %s1867 = smul.u32 7, 4
        %s1868 = smul.addr %s1867, 8
        %s1869 = scalar_lea.vmem [#allocation2], %s1868
        %v1870 = vld [vmem:[%s1869] sm:$0xff]
        %v1871 = vld [vmem:[%s1869 + $0x8] sm:$0xff]
        %v1872 = vld [vmem:[%s1869 + $0x10] sm:$0xff]
        %v1873 = vld [vmem:[%s1869 + $0x18] sm:$0xff]
        %1874 = vmatprep.subr.mxu0 %v550
        %1875 = vmatpush1.msra.mxu0 %v549
        %1876 = vmatprep.subr.mxu0 %v554
        %1877 = vmatpush1.msra.mxu0 %v553
        %1878 = vmatprep.subr.mxu0 %v558
        %1879 = vmatpush1.msra.mxu0 %v557
        %1880 = vmatprep.subr.mxu0 %v562
        %1881 = vmatpush1.msra.mxu0 %v561
        %1882 = vmatprep.subr.mxu0 %v566
        %1883 = vmatpush1.msra.mxu0 %v565
        %1884 = vmatprep.subr.mxu0 %v570
        %1885 = vmatpush1.msra.mxu0 %v569
        %1886 = vmatprep.subr.mxu0 %v574
        %1887 = vmatpush1.msra.mxu0 %v573
        %1888 = vmatprep.subr.mxu0 %v578
        %1889 = vmatpush1.msra.mxu0 %v577
        %1890 = vmatprep.subr.mxu0 %v582
        %1891 = vmatpush1.msra.mxu0 %v581
        %1892 = vmatprep.subr.mxu0 %v586
        %1893 = vmatpush1.msra.mxu0 %v585
        %1894 = vmatprep.subr.mxu0 %v590
        %1895 = vmatpush1.msra.mxu0 %v589
        %1896 = vmatprep.subr.mxu0 %v594
        %1897 = vmatpush1.msra.mxu0 %v593
        %1898 = vmatprep.subr.mxu0 %v598
        %1899 = vmatpush1.msra.mxu0 %v597
        %1900 = vmatprep.subr.mxu0 %v602
        %1901 = vmatpush1.msra.mxu0 %v601
        %1902 = vmatprep.subr.mxu0 %v606
        %1903 = vmatpush1.msra.mxu0 %v605
        %1904 = vmatprep.subr.mxu0 %v610
        %1905 = vmatpush1.msra.mxu0 %v609
        %1906 = vmatprep.subr.mxu0 0.0
        %1907 = vmatpush1.msra.mxu0 0.0
        %1908 = vmatprep.subr.mxu0 0.0
        %1909 = vmatpush1.msra.mxu0 0.0
        %1910 = vmatprep.subr.mxu0 0.0
        %1911 = vmatpush1.msra.mxu0 0.0
        %1912 = vmatprep.subr.mxu0 0.0
        %1913 = vmatpush1.msra.mxu0 0.0
        %1914 = vmatprep.subr.mxu0 0.0
        %1915 = vmatpush1.msra.mxu0 0.0
        %1916 = vmatprep.subr.mxu0 0.0
        %1917 = vmatpush1.msra.mxu0 0.0
        %1918 = vmatprep.subr.mxu0 0.0
        %1919 = vmatpush1.msra.mxu0 0.0
        %1920 = vmatprep.subr.mxu0 0.0
        %1921 = vmatpush1.msra.mxu0 0.0
        %1922 = vmatprep.subr.mxu0 0.0
        %1923 = vmatpush1.msra.mxu0 0.0
        %1924 = vmatprep.subr.mxu0 0.0
        %1925 = vmatpush1.msra.mxu0 0.0
        %1926 = vmatprep.subr.mxu0 0.0
        %1927 = vmatpush1.msra.mxu0 0.0
        %1928 = vmatprep.subr.mxu0 0.0
        %1929 = vmatpush1.msra.mxu0 0.0
        %1930 = vmatprep.subr.mxu0 0.0
        %1931 = vmatpush1.msra.mxu0 0.0
        %1932 = vmatprep.subr.mxu0 0.0
        %1933 = vmatpush1.msra.mxu0 0.0
        %1934 = vmatprep.subr.mxu0 0.0
        %1935 = vmatpush1.msra.mxu0 0.0
        %1936 = vmatprep.subr.mxu0 0.0
        %1937 = vmatpush1.msra.mxu0 0.0
        %1938 = vmatprep.mubr.f32.mxu0 0.0
        %1939 = vmatmul.mubr.f32.gmra.mrb[0].mxu0 %v1864
        %v1940 = vpop.f32.mrb[0].mxu0
        %v1941 = vadd.f32 0.0, %v1940
        %v1942 = vpop.f32.mrb[0].mxu0
        %v1943 = vadd.f32 0.0, %v1942
        %1944 = vdwg.mxu0
        %1945 = vmatprep.subr.mxu0 %v552
        %1946 = vmatpush1.msra.mxu0 %v551
        %1947 = vmatprep.subr.mxu0 %v556
        %1948 = vmatpush1.msra.mxu0 %v555
        %1949 = vmatprep.subr.mxu0 %v560
        %1950 = vmatpush1.msra.mxu0 %v559
        %1951 = vmatprep.subr.mxu0 %v564
        %1952 = vmatpush1.msra.mxu0 %v563
        %1953 = vmatprep.subr.mxu0 %v568
        %1954 = vmatpush1.msra.mxu0 %v567
        %1955 = vmatprep.subr.mxu0 %v572
        %1956 = vmatpush1.msra.mxu0 %v571
        %1957 = vmatprep.subr.mxu0 %v576
        %1958 = vmatpush1.msra.mxu0 %v575
        %1959 = vmatprep.subr.mxu0 %v580
        %1960 = vmatpush1.msra.mxu0 %v579
        %1961 = vmatprep.subr.mxu0 %v584
        %1962 = vmatpush1.msra.mxu0 %v583
        %1963 = vmatprep.subr.mxu0 %v588
        %1964 = vmatpush1.msra.mxu0 %v587
        %1965 = vmatprep.subr.mxu0 %v592
        %1966 = vmatpush1.msra.mxu0 %v591
        %1967 = vmatprep.subr.mxu0 %v596
        %1968 = vmatpush1.msra.mxu0 %v595
        %1969 = vmatprep.subr.mxu0 %v600
        %1970 = vmatpush1.msra.mxu0 %v599
        %1971 = vmatprep.subr.mxu0 %v604
        %1972 = vmatpush1.msra.mxu0 %v603
        %1973 = vmatprep.subr.mxu0 %v608
        %1974 = vmatpush1.msra.mxu0 %v607
        %1975 = vmatprep.subr.mxu0 %v612
        %1976 = vmatpush1.msra.mxu0 %v611
        %1977 = vmatprep.subr.mxu0 0.0
        %1978 = vmatpush1.msra.mxu0 0.0
        %1979 = vmatprep.subr.mxu0 0.0
        %1980 = vmatpush1.msra.mxu0 0.0
        %1981 = vmatprep.subr.mxu0 0.0
        %1982 = vmatpush1.msra.mxu0 0.0
        %1983 = vmatprep.subr.mxu0 0.0
        %1984 = vmatpush1.msra.mxu0 0.0
        %1985 = vmatprep.subr.mxu0 0.0
        %1986 = vmatpush1.msra.mxu0 0.0
        %1987 = vmatprep.subr.mxu0 0.0
        %1988 = vmatpush1.msra.mxu0 0.0
        %1989 = vmatprep.subr.mxu0 0.0
        %1990 = vmatpush1.msra.mxu0 0.0
        %1991 = vmatprep.subr.mxu0 0.0
        %1992 = vmatpush1.msra.mxu0 0.0
        %1993 = vmatprep.subr.mxu0 0.0
        %1994 = vmatpush1.msra.mxu0 0.0
        %1995 = vmatprep.subr.mxu0 0.0
        %1996 = vmatpush1.msra.mxu0 0.0
        %1997 = vmatprep.subr.mxu0 0.0
        %1998 = vmatpush1.msra.mxu0 0.0
        %1999 = vmatprep.subr.mxu0 0.0
        %2000 = vmatpush1.msra.mxu0 0.0
        %2001 = vmatprep.subr.mxu0 0.0
        %2002 = vmatpush1.msra.mxu0 0.0
        %2003 = vmatprep.subr.mxu0 0.0
        %2004 = vmatpush1.msra.mxu0 0.0
        %2005 = vmatprep.subr.mxu0 0.0
        %2006 = vmatpush1.msra.mxu0 0.0
        %2007 = vmatprep.subr.mxu0 0.0
        %2008 = vmatpush1.msra.mxu0 0.0
        %2009 = vmatprep.mubr.f32.mxu0 0.0
        %2010 = vmatmul.mubr.f32.gmra.mrb[0].mxu0 %v1864
        %v2011 = vpop.f32.mrb[0].mxu0
        %v2012 = vadd.f32 0.0, %v2011
        %v2013 = vpop.f32.mrb[0].mxu0
        %v2014 = vadd.f32 0.0, %v2013
        %2015 = vdwg.mxu0
        %v2016 = vadd.f32 %v1870, %v1941
        %v2017 = vadd.f32 %v1871, %v1943
        %v2018 = vadd.f32 %v1872, %v2012
        %v2019 = vadd.f32 %v1873, %v2014
        %v2020 = vxor.u32 %v2016, 2147483648
        %v2021 = vmul.f32 %v2020, 1.442695
        %v2022 = vpow.pop %v2021
        %v2023 = vadd.f32 %v2022, 1.0
        %v2024 = vrcp.pop %v2023
        %v2025 = vmul.f32 1.0, %v2024
        %v2026 = vxor.u32 %v2017, 2147483648
        %v2027 = vmul.f32 %v2026, 1.442695
        %v2028 = vpow.pop %v2027
        %v2029 = vadd.f32 %v2028, 1.0
        %v2030 = vrcp.pop %v2029
        %v2031 = vmul.f32 1.0, %v2030
        %v2032 = vtanh.pop %v2018
        %v2033 = vxor.u32 %v2019, 2147483648
        %v2034 = vmul.f32 %v2033, 1.442695
        %v2035 = vpow.pop %v2034
        %v2036 = vadd.f32 %v2035, 1.0
        %v2037 = vrcp.pop %v2036
        %v2038 = vmul.f32 1.0, %v2037
        %v2039 = vmul.f32 %v2031, %v1862
        %v2040 = vmul.f32 %v2025, %v2032
        %v2041 = vadd.f32 %v2039, %v2040
        %v2042 = vtanh.pop %v2041
        %v2043 = vmul.f32 %v2038, %v2042
        %s2044 = scalar_lea.vmem %s206, 56 [#allocation8]
        %2045 = vst [vmem:[%s2044] sm:$0xff] %v2043
        %2046 = vst [vmem:[#allocation3] sm:$0xff] %v2043
        %2047 = vst [vmem:[#allocation4] sm:$0xff] %v2041
        %s2048 = sand.u32 %s116, 1
        %s2049 = scalar_lea.sflag [#allocation7], %s2048
        %s2050 = sand.u32 %s116, 1
        %s2051 = smul.addr %s2050, 64
        %s2052 = scalar_lea.vmem [#allocation8], %s2051
        // Predicated region
        $region45: #{tpu_custom_call.1} parent=35 // pred_check
          %p2053 = pneg %p126
        $region46: #{tpu_custom_call.1} parent=35 // pred_check_branch
          %2055 = sbr.rel (%p2053) target = $region48
        $region47: #{tpu_custom_call.1} parent=35 // pred_region
          %s2056 = smul.u32 8, %s19
          %s2058 = ssub.s32 1024, 1024
          %2059 = vsyncadd %s2049, %s2058
          %s2060 = smul.addr %s2056, 128
          %s2061 = scalar_lea.hbm %s4, %s2060
          %s2062 = sshll.u32 %s2052, 4
          %s2063 = int_to_ptr.vmem [resolvable:$true] %s2062
          %2068 = dma.vmem_to_hbm [thread:$0]  %s2063, 1024, %s2061, %s2049, 128, 128, 8
        $region48: #{tpu_custom_call.1} parent=35 // pred_fallthru
          _
      $region36: #{tpu_custom_call.1} parent=5 // pred_fallthru
        _
      %p2069 = scmp.le.s32.totalorder 2, %s14
      // Predicated region
      $region49: #{tpu_custom_call.1} parent=5 // pred_check
        %p2070 = pneg %p2069
      $region50: #{tpu_custom_call.1} parent=5 // pred_check_branch
        %2072 = sbr.rel (%p2070) target = $region52
      $region51: #{tpu_custom_call.1} parent=5 // pred_region
        %s2073 = ssub.s32 %s14, 2
        // Predicated region
        $region53: #{tpu_custom_call.1} parent=51 // pred_check
          %p2074 = pneg %p132
        $region54: #{tpu_custom_call.1} parent=51 // pred_check_branch
          %2076 = sbr.rel (%p2074) target = $region56
        $region55: #{tpu_custom_call.1} parent=51 // pred_region
          %s2077 = sand.u32 %s117, 1
          %s2078 = scalar_lea.sflag [#allocation7], %s2077
          %s2079 = sand.u32 %s117, 1
          %s2080 = smul.addr %s2079, 64
          %s2081 = scalar_lea.vmem [#allocation8], %s2080
          %2082 = dma.done %s2078, 1024
        $region56: #{tpu_custom_call.1} parent=51 // pred_fallthru
          _
      $region52: #{tpu_custom_call.1} parent=5 // pred_fallthru
        _
    $region6: #{tpu_custom_call.1} parent=1 // loop_footer
      %s18 = sadd.s32 1, %s14
    $region7: #{tpu_custom_call.1} parent=1 // loop_footer_branch
      %13 = sbr.rel target = $region3
    $region8: #{tpu_custom_call.1} parent=1 // loop_exit
      _
    %2083 = vsyncpa [#allocation6], 1
    %s2084 = scalar_lea.sflag [#allocation6], 1
    %2085 = vsyncpa %s2084, 1
    %2086 = vsyncpa [#allocation7], 1
    %s2087 = scalar_lea.sflag [#allocation7], 1
    %2088 = vsyncpa %s2087, 1

</llo_original>
